<compile_context>
chip_gen: v6e
topology: v6e:2x2x1
jax: 0.10.0
libtpu: 0.0.40
codegen_flags: <defaults>
</compile_context>

<pallas_src>
import jax
import jax.numpy as jnp
from jax import lax
from jax.experimental import pallas as pl
from jax.experimental.pallas import tpu as pltpu

_LANE = 128
_HP = lax.Precision.HIGHEST     # exact f32 parity; MXU is nowhere near the bottleneck

# Tile caps chosen so (buffers + temps) stay well under the 32 MiB scoped-VMEM
# default on every chip (v7x has only 64 MiB physical VMEM):
_MAX_TB_T = 32768    # lane-dense path: ~100 B VMEM per batch element
_MAX_TB_PT = 4096    # PyTorch-layout path: lane-padded blocks, ~3.4 KB per element


def _round_up(n, m):
    return -(-n // m) * m


def _plan_batch(B, block_b, max_tb, min_steps=2):
    """Pick a 128-aligned batch tile `tb`, padded batch `steps*tb`, and `steps`.

    Guarantees >=2 grid steps whenever B > 128 (v7x: 2 TensorCores share the
    "parallel" axis) and keeps padding waste small for ragged B.
    """
    block_b = max(_LANE, (min(block_b, max_tb) // _LANE) * _LANE)
    bp = _round_up(B, _LANE)
    steps = -(-bp // block_b)
    if bp > _LANE:
        steps = max(steps, min_steps)
    tb = _round_up(-(-bp // steps), _LANE)
    return tb, steps * tb, steps


# ----------------------------- kernels ---------------------------------------

def _mlp_kernel_t(x_ref, w1_ref, b1_ref, w2_ref, b2_ref, w3_ref, b3_ref, o_ref):
    """Lane-dense MLP: x_ref (in, tb), o_ref (out, tb); batch on lanes."""
    x = x_ref[...]
    h = jnp.dot(w1_ref[...], x, preferred_element_type=jnp.float32, precision=_HP)
    h = jnp.maximum(h + b1_ref[...].astype(jnp.float32), 0.0)
    h = jnp.dot(w2_ref[...], h, preferred_element_type=jnp.float32, precision=_HP)
    h = jnp.maximum(h + b2_ref[...].astype(jnp.float32), 0.0)
    y = jnp.dot(w3_ref[...], h, preferred_element_type=jnp.float32, precision=_HP)
    o_ref[...] = (y + b3_ref[...].astype(jnp.float32)).astype(o_ref.dtype)


def _mlp_kernel_pt(x_ref, w1_ref, b1_ref, w2_ref, b2_ref, w3_ref, b3_ref, o_ref):
    """PyTorch-layout MLP: x_ref (tb, in), o_ref (tb, out).

    The (tb, in) block is reoriented by the first dot_general (contraction over
    both operands' last dim) so the compute stays lane-dense; the small
    (out, tb) result is transposed in VMEM/XLU for the store.  No HBM transpose.
    """
    x = x_ref[...]
    h = lax.dot_general(w1_ref[...], x, (((1,), (1,)), ((), ())),
                        preferred_element_type=jnp.float32, precision=_HP)  # (hidden, tb)
    h = jnp.maximum(h + b1_ref[...].astype(jnp.float32), 0.0)
    h = jnp.dot(w2_ref[...], h, preferred_element_type=jnp.float32, precision=_HP)
    h = jnp.maximum(h + b2_ref[...].astype(jnp.float32), 0.0)
    y = jnp.dot(w3_ref[...], h, preferred_element_type=jnp.float32, precision=_HP)
    y = y + b3_ref[...].astype(jnp.float32)                                  # (out, tb)
    o_ref[...] = y.T.astype(o_ref.dtype)                                     # (tb, out)


# ----------------------------- wrappers ---------------------------------------

def _cost(bp, in_size, hidden, out_size, arrays):
    flops = 2 * bp * (in_size * hidden + hidden * hidden + hidden * out_size)
    bytes_accessed = bp * out_size * 4 + sum(
        int(a.size) * a.dtype.itemsize for a in arrays)
    return pl.CostEstimate(flops=flops, transcendentals=0,
                           bytes_accessed=bytes_accessed)


def immune_cell_network_t(x_t, w1, b1, w2, b2, w3, b3, *,
                          block_b=16384, x_buffers=2):
    """Fast path.  x_t: (in_size, B); returns (out_size, B).  Zero transposes."""
    in_size, B = x_t.shape
    hidden, out_size = w1.shape[0], w3.shape[0]
    tb, bp, steps = _plan_batch(B, block_b, _MAX_TB_T)
    if bp != B:
        x_t = jnp.pad(x_t, ((0, 0), (0, bp - B)))

    b1c, b2c, b3c = b1.reshape(-1, 1), b2.reshape(-1, 1), b3.reshape(-1, 1)
    resident = lambda s: pl.BlockSpec(s, lambda i: (0, 0))   # weights stay VMEM-resident
    if x_buffers != 2:   # optional deeper pipelining on the streamed operand
        x_spec = pl.BlockSpec((in_size, tb), lambda i: (0, i),
                              pipeline_mode=pl.Buffered(x_buffers))
    else:
        x_spec = pl.BlockSpec((in_size, tb), lambda i: (0, i))

    out_t = pl.pallas_call(
        _mlp_kernel_t,
        out_shape=jax.ShapeDtypeStruct((out_size, bp), jnp.float32),
        grid=(steps,),
        in_specs=[x_spec,
                  resident(w1.shape), resident(b1c.shape),
                  resident(w2.shape), resident(b2c.shape),
                  resident(w3.shape), resident(b3c.shape)],
        out_specs=pl.BlockSpec((out_size, tb), lambda i: (0, i)),
        compiler_params=pltpu.CompilerParams(dimension_semantics=("parallel",)),
        cost_estimate=_cost(bp, in_size, hidden, out_size,
                            (x_t, w1, b1c, w2, b2c, w3, b3c)),
    )(x_t, w1, b1c, w2, b2c, w3, b3c)
    return out_t[:, :B] if bp != B else out_t


def immune_cell_forward(x, w1, b1, w2, b2, w3, b3, *, block_b=4096, x_buffers=2):
    """PyTorch layout.  x: (B, in_size); returns (B, out_size).

    Layout reorientation is done inside the kernel (VMEM/MXU/XLU), not via HBM
    transposes.  Smaller tile cap because (tb,16)/(tb,8) blocks are lane-padded
    8x in VMEM.  For maximum throughput prefer `immune_cell_network_t`.
    """
    B, in_size = x.shape
    hidden, out_size = w1.shape[0], w3.shape[0]
    tb, bp, steps = _plan_batch(B, block_b, _MAX_TB_PT)
    if bp != B:
        x = jnp.pad(x, ((0, bp - B), (0, 0)))

    b1c, b2c, b3c = b1.reshape(-1, 1), b2.reshape(-1, 1), b3.reshape(-1, 1)
    resident = lambda s: pl.BlockSpec(s, lambda i: (0, 0))
    if x_buffers != 2:
        x_spec = pl.BlockSpec((tb, in_size), lambda i: (i, 0),
                              pipeline_mode=pl.Buffered(x_buffers))
    else:
        x_spec = pl.BlockSpec((tb, in_size), lambda i: (i, 0))

    out = pl.pallas_call(
        _mlp_kernel_pt,
        out_shape=jax.ShapeDtypeStruct((bp, out_size), jnp.float32),
        grid=(steps,),
        in_specs=[x_spec,
                  resident(w1.shape), resident(b1c.shape),
                  resident(w2.shape), resident(b2c.shape),
                  resident(w3.shape), resident(b3c.shape)],
        out_specs=pl.BlockSpec((tb, out_size), lambda i: (i, 0)),
        compiler_params=pltpu.CompilerParams(dimension_semantics=("parallel",)),
        cost_estimate=_cost(bp, in_size, hidden, out_size,
                            (x, w1, b1c, w2, b2c, w3, b3c)),
    )(x, w1, b1c, w2, b2c, w3, b3c)
    return out[:B] if bp != B else out


# --- PyTorch-equivalent initializers (PyTorch weight layout: (out, in)) -------

def xavier_uniform(key, fan_in, fan_out):
    bound = (6.0 / (fan_in + fan_out)) ** 0.5
    return jax.random.uniform(key, (fan_out, fan_in), jnp.float32, -bound, bound)


def linear_bias_init(key, fan_in, fan_out):
    bound = 1.0 / (fan_in ** 0.5)
    return jax.random.uniform(key, (fan_out,), jnp.float32, -bound, bound)


if __name__ == "__main__":
    # Small shapes consistent with the module.  batch=300 deliberately exercises
    # the pad-to-128 path and the >=2-step grid.
    batch, input_size, hidden_size, output_size = 300, 16, 32, 8

    key = jax.random.PRNGKey(0)
    kx, k1, k2, k3, kb1, kb2, kb3 = jax.random.split(key, 7)

    x = jax.random.normal(kx, (batch, input_size), jnp.float32)
    w1 = xavier_uniform(k1, input_size, hidden_size)     # (hidden, input)
    b1 = linear_bias_init(kb1, input_size, hidden_size)
    w2 = xavier_uniform(k2, hidden_size, hidden_size)    # (hidden, hidden)
    b2 = linear_bias_init(kb2, hidden_size, hidden_size)
    w3 = xavier_uniform(k3, hidden_size, output_size)    # (output, hidden)
    b3 = linear_bias_init(kb3, hidden_size, output_size)

    # Pure-JAX reference (PyTorch semantics: x @ W.T + b), f32 HIGHEST like the kernel.
    h = jnp.maximum(jnp.dot(x, w1.T, precision=_HP) + b1, 0.0)
    h = jnp.maximum(jnp.dot(h, w2.T, precision=_HP) + b2, 0.0)
    ref = jnp.dot(h, w3.T, precision=_HP) + b3

    # Path 1: PyTorch layout in/out (module-equivalent forward).
    out = immune_cell_forward(x, w1, b1, w2, b2, w3, b3)
    jax.block_until_ready(out)
    assert out.shape == (batch, output_size)
    assert jnp.allclose(out, ref, atol=1e-4, rtol=1e-4), float(
        jnp.max(jnp.abs(out - ref)))

    # Path 2: lane-dense producer/consumer layout (fast path; the .T here is
    # test-harness plumbing only — a real producer hands over (in_size, B)).
    out_t = immune_cell_network_t(jnp.asarray(x.T), w1, b1, w2, b2, w3, b3)
    jax.block_until_ready(out_t)
    assert out_t.shape == (output_size, batch)
    assert jnp.allclose(out_t.T, ref, atol=1e-4, rtol=1e-4), float(
        jnp.max(jnp.abs(out_t.T - ref)))

    print("KERNEL_OK")
</pallas_src>

<mosaic_0001>
module attributes {stable_mosaic.version = 11 : i64} {
  func.func @_mlp_kernel_pt(%arg0: i32, %arg1: memref<256x16xf32, #tpu.memory_space<vmem>>, %arg2: memref<32x16xf32, #tpu.memory_space<vmem>>, %arg3: memref<32x1xf32, #tpu.memory_space<vmem>>, %arg4: memref<32x32xf32, #tpu.memory_space<vmem>>, %arg5: memref<32x1xf32, #tpu.memory_space<vmem>>, %arg6: memref<8x32xf32, #tpu.memory_space<vmem>>, %arg7: memref<8x1xf32, #tpu.memory_space<vmem>>, %arg8: memref<256x8xf32, #tpu.memory_space<vmem>>) attributes {dimension_semantics = [#tpu.dimension_semantics<parallel>], iteration_bounds = array<i64: 2>, scalar_prefetch = 0 : i64, scratch_operands = 0 : i64, tpu.core_type = #tpu.core_type<tc>, window_params = [{transform_indices = @transform_0, window_bounds = array<i64: 256, 16>}, {pipeline_mode = #tpu.pipeline_mode<synchronous>, transform_indices = @transform_1, window_bounds = array<i64: 32, 16>}, {pipeline_mode = #tpu.pipeline_mode<synchronous>, transform_indices = @transform_2, window_bounds = array<i64: 32, 1>}, {pipeline_mode = #tpu.pipeline_mode<synchronous>, transform_indices = @transform_3, window_bounds = array<i64: 32, 32>}, {pipeline_mode = #tpu.pipeline_mode<synchronous>, transform_indices = @transform_4, window_bounds = array<i64: 32, 1>}, {pipeline_mode = #tpu.pipeline_mode<synchronous>, transform_indices = @transform_5, window_bounds = array<i64: 8, 32>}, {pipeline_mode = #tpu.pipeline_mode<synchronous>, transform_indices = @transform_6, window_bounds = array<i64: 8, 1>}, {transform_indices = @transform_7, window_bounds = array<i64: 256, 8>}]} {
    %c0 = arith.constant 0 : index
    %c0_0 = arith.constant 0 : index
    %0 = vector.load %arg1[%c0, %c0_0] : memref<256x16xf32, #tpu.memory_space<vmem>>, vector<256x16xf32>
    %c0_1 = arith.constant 0 : index
    %c0_2 = arith.constant 0 : index
    %1 = vector.load %arg2[%c0_1, %c0_2] : memref<32x16xf32, #tpu.memory_space<vmem>>, vector<32x16xf32>
    %cst = arith.constant dense<0.000000e+00> : vector<32x256xf32>
    %2 = tpu.matmul %1, %0, %cst {dimension_numbers = #tpu.dot_dimension_numbers<[1], [1], [0], [0], [0, 0, 1, 0], [], []>, precision = #tpu.contract_precision<fp32>} : vector<32x16xf32>, vector<256x16xf32>, vector<32x256xf32> -> vector<32x256xf32>
    %c0_3 = arith.constant 0 : index
    %c0_4 = arith.constant 0 : index
    %3 = vector.load %arg3[%c0_3, %c0_4] : memref<32x1xf32, #tpu.memory_space<vmem>>, vector<32x1xf32>
    %4 = vector.broadcast %3 : vector<32x1xf32> to vector<32x256xf32>
    %5 = arith.addf %2, %4 : vector<32x256xf32>
    %cst_5 = arith.constant 0.000000e+00 : f32
    %6 = vector.broadcast %cst_5 : f32 to vector<32x256xf32>
    %7 = arith.maximumf %5, %6 : vector<32x256xf32>
    %c0_6 = arith.constant 0 : index
    %c0_7 = arith.constant 0 : index
    %8 = vector.load %arg4[%c0_6, %c0_7] : memref<32x32xf32, #tpu.memory_space<vmem>>, vector<32x32xf32>
    %cst_8 = arith.constant dense<0.000000e+00> : vector<32x256xf32>
    %9 = tpu.matmul %8, %7, %cst_8 {dimension_numbers = #tpu.dot_dimension_numbers<[1], [0], [0], [1], [0, 0, 1, 1], [], []>, precision = #tpu.contract_precision<fp32>} : vector<32x32xf32>, vector<32x256xf32>, vector<32x256xf32> -> vector<32x256xf32>
    %c0_9 = arith.constant 0 : index
    %c0_10 = arith.constant 0 : index
    %10 = vector.load %arg5[%c0_9, %c0_10] : memref<32x1xf32, #tpu.memory_space<vmem>>, vector<32x1xf32>
    %11 = vector.broadcast %10 : vector<32x1xf32> to vector<32x256xf32>
    %12 = arith.addf %9, %11 : vector<32x256xf32>
    %cst_11 = arith.constant 0.000000e+00 : f32
    %13 = vector.broadcast %cst_11 : f32 to vector<32x256xf32>
    %14 = arith.maximumf %12, %13 : vector<32x256xf32>
    %c0_12 = arith.constant 0 : index
    %c0_13 = arith.constant 0 : index
    %15 = vector.load %arg6[%c0_12, %c0_13] : memref<8x32xf32, #tpu.memory_space<vmem>>, vector<8x32xf32>
    %cst_14 = arith.constant dense<0.000000e+00> : vector<8x256xf32>
    %16 = tpu.matmul %15, %14, %cst_14 {dimension_numbers = #tpu.dot_dimension_numbers<[1], [0], [0], [1], [0, 0, 1, 1], [], []>, precision = #tpu.contract_precision<fp32>} : vector<8x32xf32>, vector<32x256xf32>, vector<8x256xf32> -> vector<8x256xf32>
    %c0_15 = arith.constant 0 : index
    %c0_16 = arith.constant 0 : index
    %17 = vector.load %arg7[%c0_15, %c0_16] : memref<8x1xf32, #tpu.memory_space<vmem>>, vector<8x1xf32>
    %18 = vector.broadcast %17 : vector<8x1xf32> to vector<8x256xf32>
    %19 = arith.addf %16, %18 : vector<8x256xf32>
    %20 = tpu.transpose %19, [1, 0] : vector<8x256xf32> -> vector<256x8xf32>
    %c0_17 = arith.constant 0 : index
    %c0_18 = arith.constant 0 : index
    %21 = vector.load %arg8[%c0_17, %c0_18] : memref<256x8xf32, #tpu.memory_space<vmem>>, vector<256x8xf32>
    tpu.vector_store %arg8[%c0_17, %c0_18], %20 {strides = array<i32>} : memref<256x8xf32, #tpu.memory_space<vmem>>, vector<256x8xf32>,
    return
  }
  func.func @transform_0(%arg0: i32) -> (i32, i32) {
    %c0_i32 = arith.constant 0 : i32
    %c0_i32_0 = arith.constant 0 : i32
    return %arg0, %c0_i32 : i32, i32
  }
  func.func @transform_1(%arg0: i32) -> (i32, i32) {
    %c0_i32 = arith.constant 0 : i32
    %c0_i32_0 = arith.constant 0 : i32
    %c0_i32_1 = arith.constant 0 : i32
    return %c0_i32, %c0_i32_0 : i32, i32
  }
  func.func @transform_2(%arg0: i32) -> (i32, i32) {
    %c0_i32 = arith.constant 0 : i32
    %c0_i32_0 = arith.constant 0 : i32
    %c0_i32_1 = arith.constant 0 : i32
    return %c0_i32, %c0_i32_0 : i32, i32
  }
  func.func @transform_3(%arg0: i32) -> (i32, i32) {
    %c0_i32 = arith.constant 0 : i32
    %c0_i32_0 = arith.constant 0 : i32
    %c0_i32_1 = arith.constant 0 : i32
    return %c0_i32, %c0_i32_0 : i32, i32
  }
  func.func @transform_4(%arg0: i32) -> (i32, i32) {
    %c0_i32 = arith.constant 0 : i32
    %c0_i32_0 = arith.constant 0 : i32
    %c0_i32_1 = arith.constant 0 : i32
    return %c0_i32, %c0_i32_0 : i32, i32
  }
  func.func @transform_5(%arg0: i32) -> (i32, i32) {
    %c0_i32 = arith.constant 0 : i32
    %c0_i32_0 = arith.constant 0 : i32
    %c0_i32_1 = arith.constant 0 : i32
    return %c0_i32, %c0_i32_0 : i32, i32
  }
  func.func @transform_6(%arg0: i32) -> (i32, i32) {
    %c0_i32 = arith.constant 0 : i32
    %c0_i32_0 = arith.constant 0 : i32
    %c0_i32_1 = arith.constant 0 : i32
    return %c0_i32, %c0_i32_0 : i32, i32
  }
  func.func @transform_7(%arg0: i32) -> (i32, i32) {
    %c0_i32 = arith.constant 0 : i32
    %c0_i32_0 = arith.constant 0 : i32
    return %arg0, %c0_i32 : i32, i32
  }
}

</mosaic_0001>

<llo_original>
// kernel: tpu_custom_call.1
$region0: #{tpu_custom_call.1}
  #allocation0 [shape = 'u32[]', space=smem, size = 0x4, offset = 0x4, fixed_abs, tag = 'smem constant byte address 0x4 - core index']
  #allocation1 [shape = 'u32[144,128]{1,0:T(1,128)}', space=vmem, size = 0x12000, scoped, tag = 'internal scratch']
  %s0 = inlined_call_operand.vmem [shape: f32[512,16], index: 0, kind: input, shape index: {}]
  %s1 = inlined_call_operand.vmem [shape: f32[32,16], index: 1, kind: input, shape index: {}]
  %s2 = inlined_call_operand.vmem [shape: f32[32,1], index: 2, kind: input, shape index: {}]
  %s3 = inlined_call_operand.vmem [shape: f32[32,32], index: 3, kind: input, shape index: {}]
  %s4 = inlined_call_operand.vmem [shape: f32[32,1], index: 4, kind: input, shape index: {}]
  %s5 = inlined_call_operand.vmem [shape: f32[8,32], index: 5, kind: input, shape index: {}]
  %s6 = inlined_call_operand.vmem [shape: f32[8,1], index: 6, kind: input, shape index: {}]
  %s7 = inlined_call_operand.vmem [shape: f32[512,8], index: 7, kind: output, shape index: {}]
  %s8 = sld [smem:[#allocation0]]
  $region61: #{tpu_custom_call.1} parent=0
    _
  %s10 = ssub.s32 1, %s8
  %s11 = scalar_select 0, %s10, %s8
  loop: start=0, step=1, limit=4
  $region2: #{tpu_custom_call.1} parent=0 // loop_pre_header
    _
  $region3: #{tpu_custom_call.1} parent=0 // loop_header
    %s13 = sphi 0, %s17
    %p14 = scmp.ge.s32.totalorder %s13, 4
    %s23 = sphi 0, %s25
    %s26 = sphi 0, %s23
    %s27 = sphi 0, %s26
    %s43 = sphi 0, %s27
    %s47 = sphi 0, %s47
    %s49 = sphi 0, %s47
    %s50 = sphi 0, %s49
    %s64 = sphi 0, %s50
    %s68 = sphi 0, %s68
    %s70 = sphi 0, %s68
    %s71 = sphi 0, %s70
    %s85 = sphi 0, %s71
    %s89 = sphi 0, %s89
    %s91 = sphi 0, %s89
    %s92 = sphi 0, %s91
    %s106 = sphi 0, %s92
    %s110 = sphi 0, %s110
    %s112 = sphi 0, %s110
    %s113 = sphi 0, %s112
    %s127 = sphi 0, %s113
    %s131 = sphi 0, %s131
    %s133 = sphi 0, %s131
    %s134 = sphi 0, %s133
    %s148 = sphi 0, %s134
    %s152 = sphi 0, %s152
    %s154 = sphi 0, %s152
    %s155 = sphi 0, %s154
    %s169 = sphi 0, %s155
    %s175 = sphi 0, %s177
    %s178 = sphi 0, %s175
    %s179 = sphi 0, %s178
    %s195 = sphi 0, %s179
  $region4: #{tpu_custom_call.1} parent=0 // loop_header_branch
    %16 = sbr.rel (%p14) target = $region8
  $region5: #{tpu_custom_call.1} parent=0 // loop_body
    %s18 = ssub.s32 %s13, 1
    %s19 = ssub.s32 %s13, 2
    %s20 = sadd.s32 %s13, 1
    %s21 = ssub.s32 %s13, %s20
    %p22 = scmp.eq.s32.totalorder %s21, 0
    %s24 = sadd.s32 %s23, 1
    %s25 = scalar_select %p22, %s23, %s24
    %p28 = pneg %p22
    %p29 = scmp.eq.s32.totalorder %s13, 1
    %p30 = por %p28, %p29
    %p31 = scmp.ne.s32.totalorder %s23, %s26
    %p32 = scmp.eq.s32.totalorder %s13, 0
    %p33 = por %p31, %p32
    %p34 = scmp.ne.s32.totalorder %s23, %s26
    %p35 = scmp.eq.s32.totalorder %s18, 1
    %p36 = por %p34, %p35
    %p37 = scmp.ne.s32.totalorder %s26, %s27
    %p38 = scmp.eq.s32.totalorder %s18, 0
    %p39 = por %p37, %p38
    %p40 = scmp.ne.s32.totalorder %s26, %s27
    %p41 = scmp.eq.s32.totalorder %s19, 1
    %p42 = por %p40, %p41
    %p44 = scmp.ne.s32.totalorder %s27, %s43
    %p45 = scmp.eq.s32.totalorder %s19, 0
    %p46 = por %p44, %p45
    %s48 = sadd.s32 %s47, 1
    %p51 = scmp.eq.s32.totalorder %s13, 1
    %p52 = scmp.ne.s32.totalorder %s47, %s49
    %p53 = scmp.eq.s32.totalorder %s13, 0
    %p54 = por %p52, %p53
    %p55 = scmp.ne.s32.totalorder %s47, %s49
    %p56 = scmp.eq.s32.totalorder %s18, 1
    %p57 = por %p55, %p56
    %p58 = scmp.ne.s32.totalorder %s49, %s50
    %p59 = scmp.eq.s32.totalorder %s18, 0
    %p60 = por %p58, %p59
    %p61 = scmp.ne.s32.totalorder %s49, %s50
    %p62 = scmp.eq.s32.totalorder %s19, 1
    %p63 = por %p61, %p62
    %p65 = scmp.ne.s32.totalorder %s50, %s64
    %p66 = scmp.eq.s32.totalorder %s19, 0
    %p67 = por %p65, %p66
    %s69 = sadd.s32 %s68, 1
    %p72 = scmp.eq.s32.totalorder %s13, 1
    %p73 = scmp.ne.s32.totalorder %s68, %s70
    %p74 = scmp.eq.s32.totalorder %s13, 0
    %p75 = por %p73, %p74
    %p76 = scmp.ne.s32.totalorder %s68, %s70
    %p77 = scmp.eq.s32.totalorder %s18, 1
    %p78 = por %p76, %p77
    %p79 = scmp.ne.s32.totalorder %s70, %s71
    %p80 = scmp.eq.s32.totalorder %s18, 0
    %p81 = por %p79, %p80
    %p82 = scmp.ne.s32.totalorder %s70, %s71
    %p83 = scmp.eq.s32.totalorder %s19, 1
    %p84 = por %p82, %p83
    %p86 = scmp.ne.s32.totalorder %s71, %s85
    %p87 = scmp.eq.s32.totalorder %s19, 0
    %p88 = por %p86, %p87
    %s90 = sadd.s32 %s89, 1
    %p93 = scmp.eq.s32.totalorder %s13, 1
    %p94 = scmp.ne.s32.totalorder %s89, %s91
    %p95 = scmp.eq.s32.totalorder %s13, 0
    %p96 = por %p94, %p95
    %p97 = scmp.ne.s32.totalorder %s89, %s91
    %p98 = scmp.eq.s32.totalorder %s18, 1
    %p99 = por %p97, %p98
    %p100 = scmp.ne.s32.totalorder %s91, %s92
    %p101 = scmp.eq.s32.totalorder %s18, 0
    %p102 = por %p100, %p101
    %p103 = scmp.ne.s32.totalorder %s91, %s92
    %p104 = scmp.eq.s32.totalorder %s19, 1
    %p105 = por %p103, %p104
    %p107 = scmp.ne.s32.totalorder %s92, %s106
    %p108 = scmp.eq.s32.totalorder %s19, 0
    %p109 = por %p107, %p108
    %s111 = sadd.s32 %s110, 1
    %p114 = scmp.eq.s32.totalorder %s13, 1
    %p115 = scmp.ne.s32.totalorder %s110, %s112
    %p116 = scmp.eq.s32.totalorder %s13, 0
    %p117 = por %p115, %p116
    %p118 = scmp.ne.s32.totalorder %s110, %s112
    %p119 = scmp.eq.s32.totalorder %s18, 1
    %p120 = por %p118, %p119
    %p121 = scmp.ne.s32.totalorder %s112, %s113
    %p122 = scmp.eq.s32.totalorder %s18, 0
    %p123 = por %p121, %p122
    %p124 = scmp.ne.s32.totalorder %s112, %s113
    %p125 = scmp.eq.s32.totalorder %s19, 1
    %p126 = por %p124, %p125
    %p128 = scmp.ne.s32.totalorder %s113, %s127
    %p129 = scmp.eq.s32.totalorder %s19, 0
    %p130 = por %p128, %p129
    %s132 = sadd.s32 %s131, 1
    %p135 = scmp.eq.s32.totalorder %s13, 1
    %p136 = scmp.ne.s32.totalorder %s131, %s133
    %p137 = scmp.eq.s32.totalorder %s13, 0
    %p138 = por %p136, %p137
    %p139 = scmp.ne.s32.totalorder %s131, %s133
    %p140 = scmp.eq.s32.totalorder %s18, 1
    %p141 = por %p139, %p140
    %p142 = scmp.ne.s32.totalorder %s133, %s134
    %p143 = scmp.eq.s32.totalorder %s18, 0
    %p144 = por %p142, %p143
    %p145 = scmp.ne.s32.totalorder %s133, %s134
    %p146 = scmp.eq.s32.totalorder %s19, 1
    %p147 = por %p145, %p146
    %p149 = scmp.ne.s32.totalorder %s134, %s148
    %p150 = scmp.eq.s32.totalorder %s19, 0
    %p151 = por %p149, %p150
    %s153 = sadd.s32 %s152, 1
    %p156 = scmp.eq.s32.totalorder %s13, 1
    %p157 = scmp.ne.s32.totalorder %s152, %s154
    %p158 = scmp.eq.s32.totalorder %s13, 0
    %p159 = por %p157, %p158
    %p160 = scmp.ne.s32.totalorder %s152, %s154
    %p161 = scmp.eq.s32.totalorder %s18, 1
    %p162 = por %p160, %p161
    %p163 = scmp.ne.s32.totalorder %s154, %s155
    %p164 = scmp.eq.s32.totalorder %s18, 0
    %p165 = por %p163, %p164
    %p166 = scmp.ne.s32.totalorder %s154, %s155
    %p167 = scmp.eq.s32.totalorder %s19, 1
    %p168 = por %p166, %p167
    %p170 = scmp.ne.s32.totalorder %s155, %s169
    %p171 = scmp.eq.s32.totalorder %s19, 0
    %p172 = por %p170, %p171
    %s173 = ssub.s32 %s13, %s20
    %p174 = scmp.eq.s32.totalorder %s173, 0
    %s176 = sadd.s32 %s175, 1
    %s177 = scalar_select %p174, %s175, %s176
    %p180 = pneg %p174
    %p181 = scmp.eq.s32.totalorder %s13, 1
    %p182 = por %p180, %p181
    %p183 = scmp.ne.s32.totalorder %s175, %s178
    %p184 = scmp.eq.s32.totalorder %s13, 0
    %p185 = por %p183, %p184
    %p186 = scmp.ne.s32.totalorder %s175, %s178
    %p187 = scmp.eq.s32.totalorder %s18, 1
    %p188 = por %p186, %p187
    %p189 = scmp.ne.s32.totalorder %s178, %s179
    %p190 = scmp.eq.s32.totalorder %s18, 0
    %p191 = por %p189, %p190
    %p192 = scmp.ne.s32.totalorder %s178, %s179
    %p193 = scmp.eq.s32.totalorder %s19, 1
    %p194 = por %p192, %p193
    %p196 = scmp.ne.s32.totalorder %s179, %s195
    %p197 = scmp.eq.s32.totalorder %s19, 0
    %p198 = por %p196, %p197
    %p199 = scmp.le.s32.totalorder 1, %s13
    %p200 = scmp.lt.s32.totalorder %s13, 3
    %p201 = pnand %p199, %p200
    %p202 = pneg %p201
    // Predicated region
    $region9: #{tpu_custom_call.1} parent=5 // pred_check
      _
    $region10: #{tpu_custom_call.1} parent=5 // pred_check_branch
      %204 = sbr.rel (%p201) target = $region12
    $region11: #{tpu_custom_call.1} parent=5 // pred_region
      %s205 = ssub.s32 %s13, 1
      // Predicated region
      $region13: #{tpu_custom_call.1} parent=11 // pred_check
        %p206 = pneg %p60
      $region14: #{tpu_custom_call.1} parent=11 // pred_check_branch
        %208 = sbr.rel (%p206) target = $region16
      $region15: #{tpu_custom_call.1} parent=11 // pred_region
        _
      $region16: #{tpu_custom_call.1} parent=11 // pred_fallthru
        _
      // Predicated region
      $region17: #{tpu_custom_call.1} parent=11 // pred_check
        %p209 = pneg %p81
      $region18: #{tpu_custom_call.1} parent=11 // pred_check_branch
        %211 = sbr.rel (%p209) target = $region20
      $region19: #{tpu_custom_call.1} parent=11 // pred_region
        _
      $region20: #{tpu_custom_call.1} parent=11 // pred_fallthru
        _
      // Predicated region
      $region21: #{tpu_custom_call.1} parent=11 // pred_check
        %p212 = pneg %p102
      $region22: #{tpu_custom_call.1} parent=11 // pred_check_branch
        %214 = sbr.rel (%p212) target = $region24
      $region23: #{tpu_custom_call.1} parent=11 // pred_region
        _
      $region24: #{tpu_custom_call.1} parent=11 // pred_fallthru
        _
      // Predicated region
      $region25: #{tpu_custom_call.1} parent=11 // pred_check
        %p215 = pneg %p123
      $region26: #{tpu_custom_call.1} parent=11 // pred_check_branch
        %217 = sbr.rel (%p215) target = $region28
      $region27: #{tpu_custom_call.1} parent=11 // pred_region
        _
      $region28: #{tpu_custom_call.1} parent=11 // pred_fallthru
        _
      // Predicated region
      $region29: #{tpu_custom_call.1} parent=11 // pred_check
        %p218 = pneg %p144
      $region30: #{tpu_custom_call.1} parent=11 // pred_check_branch
        %220 = sbr.rel (%p218) target = $region32
      $region31: #{tpu_custom_call.1} parent=11 // pred_region
        _
      $region32: #{tpu_custom_call.1} parent=11 // pred_fallthru
        _
      // Predicated region
      $region33: #{tpu_custom_call.1} parent=11 // pred_check
        %p221 = pneg %p165
      $region34: #{tpu_custom_call.1} parent=11 // pred_check_branch
        %223 = sbr.rel (%p221) target = $region36
      $region35: #{tpu_custom_call.1} parent=11 // pred_region
        _
      $region36: #{tpu_custom_call.1} parent=11 // pred_fallthru
        _
    $region12: #{tpu_custom_call.1} parent=5 // pred_fallthru
      _
    %p224 = scmp.lt.s32.totalorder %s13, 2
    // Predicated region
    $region37: #{tpu_custom_call.1} parent=5 // pred_check
      %p225 = pneg %p224
    $region38: #{tpu_custom_call.1} parent=5 // pred_check_branch
      %227 = sbr.rel (%p225) target = $region40
    $region39: #{tpu_custom_call.1} parent=5 // pred_region
      // Predicated region
      $region41: #{tpu_custom_call.1} parent=39 // pred_check
        %p228 = pneg %p33
      $region42: #{tpu_custom_call.1} parent=39 // pred_check_branch
        %230 = sbr.rel (%p228) target = $region44
      $region43: #{tpu_custom_call.1} parent=39 // pred_region
        %s231 = smul.u32 32, %s13
        %p232 = scmp.lt.s32.totalorder %s231, 63
        %s233 = scalar_select %p232, %s231, 63
        %s234 = smul.addr %s233, 8
        %s235 = scalar_lea.vmem %s0, %s234
        %s236 = smul.u32 32, %s13
      $region44: #{tpu_custom_call.1} parent=39 // pred_fallthru
        _
    $region40: #{tpu_custom_call.1} parent=5 // pred_fallthru
      _
    %p237 = scmp.le.s32.totalorder 1, %s13
    %p238 = scmp.lt.s32.totalorder %s13, 3
    %p239 = pnand %p237, %p238
    %p240 = pneg %p239
    // Predicated region
    $region45: #{tpu_custom_call.1} parent=5 // pred_check
      _
    $region46: #{tpu_custom_call.1} parent=5 // pred_check_branch
      %242 = sbr.rel (%p239) target = $region48
    $region47: #{tpu_custom_call.1} parent=5 // pred_region
      %s243 = ssub.s32 %s13, 1
      %s244 = smul.u32 32, %s18
      %p245 = scmp.lt.s32.totalorder %s244, 63
      %s246 = scalar_select %p245, %s244, 63
      %s247 = smul.addr %s246, 8
      %s248 = scalar_lea.vmem %s0, %s247
      %p249 = pneg %p39
      %p250 = pneg %p36
      %p251 = pneg %p60
      %p252 = pneg %p57
      %p253 = pneg %p81
      %p254 = pneg %p78
      %p255 = pneg %p102
      %p256 = pneg %p99
      %p257 = pneg %p123
      %p258 = pneg %p120
      %p259 = pneg %p144
      %p260 = pneg %p141
      %p261 = pneg %p165
      %p262 = pneg %p162
      %p263 = pneg %p191
      %p264 = pneg %p188
      %s265 = smul.u32 32, %s18
      %p266 = scmp.lt.s32.totalorder %s265, 63
      %s267 = scalar_select %p266, %s265, 63
      %s268 = smul.addr %s267, 8
      %s269 = scalar_lea.vmem %s7, %s268
      %s270 = smul.u32 32, %s18
      %p271 = scmp.lt.s32.totalorder %s270, 63
      %s272 = scalar_select %p271, %s270, 63
      %s273 = smul.addr %s272, 8
      %s274 = scalar_lea.vmem %s0, %s273
      %s275 = smul.u32 32, %s18
      %s276 = smul.u32 32, %s18
      %p277 = scmp.lt.s32.totalorder %s276, 63
      %s278 = scalar_select %p277, %s276, 63
      %s279 = smul.addr %s278, 8
      %s280 = scalar_lea.vmem %s7, %s279
      %s281 = smul.u32 32, %s18
      %v282 = vld [vmem:[%s274] sm:$0xff]
      %v283 = vld [vmem:[%s274 + $0x8] sm:$0xff]
      %v284 = vld [vmem:[%s274 + $0x10] sm:$0xff]
      %v285 = vld [vmem:[%s274 + $0x18] sm:$0xff]
      %v286 = vld [vmem:[%s274 + $0x20] sm:$0xff]
      %v287 = vld [vmem:[%s274 + $0x28] sm:$0xff]
      %v288 = vld [vmem:[%s274 + $0x30] sm:$0xff]
      %v289 = vld [vmem:[%s274 + $0x38] sm:$0xff]
      %v290 = vld [vmem:[%s274 + $0x40] sm:$0xff]
      %v291 = vld [vmem:[%s274 + $0x48] sm:$0xff]
      %v292 = vld [vmem:[%s274 + $0x50] sm:$0xff]
      %v293 = vld [vmem:[%s274 + $0x58] sm:$0xff]
      %v294 = vld [vmem:[%s274 + $0x60] sm:$0xff]
      %v295 = vld [vmem:[%s274 + $0x68] sm:$0xff]
      %v296 = vld [vmem:[%s274 + $0x70] sm:$0xff]
      %v297 = vld [vmem:[%s274 + $0x78] sm:$0xff]
      %v298 = vld [vmem:[%s274 + $0x80] sm:$0xff]
      %v299 = vld [vmem:[%s274 + $0x88] sm:$0xff]
      %v300 = vld [vmem:[%s274 + $0x90] sm:$0xff]
      %v301 = vld [vmem:[%s274 + $0x98] sm:$0xff]
      %v302 = vld [vmem:[%s274 + $0xa0] sm:$0xff]
      %v303 = vld [vmem:[%s274 + $0xa8] sm:$0xff]
      %v304 = vld [vmem:[%s274 + $0xb0] sm:$0xff]
      %v305 = vld [vmem:[%s274 + $0xb8] sm:$0xff]
      %v306 = vld [vmem:[%s274 + $0xc0] sm:$0xff]
      %v307 = vld [vmem:[%s274 + $0xc8] sm:$0xff]
      %v308 = vld [vmem:[%s274 + $0xd0] sm:$0xff]
      %v309 = vld [vmem:[%s274 + $0xd8] sm:$0xff]
      %v310 = vld [vmem:[%s274 + $0xe0] sm:$0xff]
      %v311 = vld [vmem:[%s274 + $0xe8] sm:$0xff]
      %v312 = vld [vmem:[%s274 + $0xf0] sm:$0xff]
      %v313 = vld [vmem:[%s274 + $0xf8] sm:$0xff]
      %v314 = vld [vmem:[%s1] sm:$0xff]
      %v315 = vld [vmem:[%s1 + $0x8] sm:$0xff]
      %v316 = vld [vmem:[%s1 + $0x10] sm:$0xff]
      %v317 = vld [vmem:[%s1 + $0x18] sm:$0xff]
      %v318 = vld [vmem:[%s2] sm:$0xff]
      %v319 = vld [vmem:[%s2 + $0x8] sm:$0xff]
      %v320 = vld [vmem:[%s2 + $0x10] sm:$0xff]
      %v321 = vld [vmem:[%s2 + $0x18] sm:$0xff]
      %323 = vset.pattern.permute.xlu0 0
      %324 = vperm.xlu0 %323, %v318
      %v325 = vpop.permute.xlu0 %324
      %328 = vset.pattern.permute.xlu0 0
      %329 = vperm.xlu0 %328, %v319
      %v330 = vpop.permute.xlu0 %329
      %333 = vset.pattern.permute.xlu0 0
      %334 = vperm.xlu0 %333, %v320
      %v335 = vpop.permute.xlu0 %334
      %338 = vset.pattern.permute.xlu0 0
      %339 = vperm.xlu0 %338, %v321
      %v340 = vpop.permute.xlu0 %339
      %vm342 = vcmask 130048
      %v344 = vsel %vm342, %v314, 0
      %v347 = vsel %vm342, %v315, 0
      %v350 = vsel %vm342, %v316, 0
      %v353 = vsel %vm342, %v317, 0
      %v356 = vsel %vm342, %v282, 0
      %v359 = vsel %vm342, %v283, 0
      %v362 = vsel %vm342, %v284, 0
      %v365 = vsel %vm342, %v285, 0
      %v368 = vsel %vm342, %v286, 0
      %v371 = vsel %vm342, %v287, 0
      %v374 = vsel %vm342, %v288, 0
      %v377 = vsel %vm342, %v289, 0
      %v380 = vsel %vm342, %v290, 0
      %v383 = vsel %vm342, %v291, 0
      %v386 = vsel %vm342, %v292, 0
      %v389 = vsel %vm342, %v293, 0
      %v392 = vsel %vm342, %v294, 0
      %v395 = vsel %vm342, %v295, 0
      %v398 = vsel %vm342, %v296, 0
      %v401 = vsel %vm342, %v297, 0
      %v404 = vsel %vm342, %v298, 0
      %v407 = vsel %vm342, %v299, 0
      %v410 = vsel %vm342, %v300, 0
      %v413 = vsel %vm342, %v301, 0
      %v416 = vsel %vm342, %v302, 0
      %v419 = vsel %vm342, %v303, 0
      %v422 = vsel %vm342, %v304, 0
      %v425 = vsel %vm342, %v305, 0
      %v428 = vsel %vm342, %v306, 0
      %v431 = vsel %vm342, %v307, 0
      %v434 = vsel %vm342, %v308, 0
      %v437 = vsel %vm342, %v309, 0
      %v440 = vsel %vm342, %v310, 0
      %v443 = vsel %vm342, %v311, 0
      %v446 = vsel %vm342, %v312, 0
      %v449 = vsel %vm342, %v313, 0
      %451 = vmatprep.subr.mxu0 0.0
      %v452 = vand.u32 %v401, 4294901760
      %453 = vmatpush1.xpose.msra.mxu0 %v452
      %454 = vmatprep.subr.mxu0 0.0
      %v455 = vand.u32 %v398, 4294901760
      %456 = vmatpush1.xpose.msra.mxu0 %v455
      %457 = vmatprep.subr.mxu0 0.0
      %v458 = vand.u32 %v395, 4294901760
      %459 = vmatpush1.xpose.msra.mxu0 %v458
      %460 = vmatprep.subr.mxu0 0.0
      %v461 = vand.u32 %v392, 4294901760
      %462 = vmatpush1.xpose.msra.mxu0 %v461
      %463 = vmatprep.subr.mxu0 0.0
      %v464 = vand.u32 %v389, 4294901760
      %465 = vmatpush1.xpose.msra.mxu0 %v464
      %466 = vmatprep.subr.mxu0 0.0
      %v467 = vand.u32 %v386, 4294901760
      %468 = vmatpush1.xpose.msra.mxu0 %v467
      %469 = vmatprep.subr.mxu0 0.0
      %v470 = vand.u32 %v383, 4294901760
      %471 = vmatpush1.xpose.msra.mxu0 %v470
      %472 = vmatprep.subr.mxu0 0.0
      %v473 = vand.u32 %v380, 4294901760
      %474 = vmatpush1.xpose.msra.mxu0 %v473
      %475 = vmatprep.subr.mxu0 0.0
      %v476 = vand.u32 %v377, 4294901760
      %477 = vmatpush1.xpose.msra.mxu0 %v476
      %478 = vmatprep.subr.mxu0 0.0
      %v479 = vand.u32 %v374, 4294901760
      %480 = vmatpush1.xpose.msra.mxu0 %v479
      %481 = vmatprep.subr.mxu0 0.0
      %v482 = vand.u32 %v371, 4294901760
      %483 = vmatpush1.xpose.msra.mxu0 %v482
      %484 = vmatprep.subr.mxu0 0.0
      %v485 = vand.u32 %v368, 4294901760
      %486 = vmatpush1.xpose.msra.mxu0 %v485
      %487 = vmatprep.subr.mxu0 0.0
      %v488 = vand.u32 %v365, 4294901760
      %489 = vmatpush1.xpose.msra.mxu0 %v488
      %490 = vmatprep.subr.mxu0 0.0
      %v491 = vand.u32 %v362, 4294901760
      %492 = vmatpush1.xpose.msra.mxu0 %v491
      %493 = vmatprep.subr.mxu0 0.0
      %v494 = vand.u32 %v359, 4294901760
      %495 = vmatpush1.xpose.msra.mxu0 %v494
      %496 = vmatprep.subr.mxu0 0.0
      %v497 = vand.u32 %v356, 4294901760
      %498 = vmatpush1.xpose.msra.mxu0 %v497
      %499 = vmatprep.subr.mxu0 0.0
      %v500 = vand.u32 %v449, 4294901760
      %501 = vmatpush2.xpose.msra.mxu0 %v500
      %502 = vmatprep.subr.mxu0 0.0
      %v503 = vand.u32 %v446, 4294901760
      %504 = vmatpush2.xpose.msra.mxu0 %v503
      %505 = vmatprep.subr.mxu0 0.0
      %v506 = vand.u32 %v443, 4294901760
      %507 = vmatpush2.xpose.msra.mxu0 %v506
      %508 = vmatprep.subr.mxu0 0.0
      %v509 = vand.u32 %v440, 4294901760
      %510 = vmatpush2.xpose.msra.mxu0 %v509
      %511 = vmatprep.subr.mxu0 0.0
      %v512 = vand.u32 %v437, 4294901760
      %513 = vmatpush2.xpose.msra.mxu0 %v512
      %514 = vmatprep.subr.mxu0 0.0
      %v515 = vand.u32 %v434, 4294901760
      %516 = vmatpush2.xpose.msra.mxu0 %v515
      %517 = vmatprep.subr.mxu0 0.0
      %v518 = vand.u32 %v431, 4294901760
      %519 = vmatpush2.xpose.msra.mxu0 %v518
      %520 = vmatprep.subr.mxu0 0.0
      %v521 = vand.u32 %v428, 4294901760
      %522 = vmatpush2.xpose.msra.mxu0 %v521
      %523 = vmatprep.subr.mxu0 0.0
      %v524 = vand.u32 %v425, 4294901760
      %525 = vmatpush2.xpose.msra.mxu0 %v524
      %526 = vmatprep.subr.mxu0 0.0
      %v527 = vand.u32 %v422, 4294901760
      %528 = vmatpush2.xpose.msra.mxu0 %v527
      %529 = vmatprep.subr.mxu0 0.0
      %v530 = vand.u32 %v419, 4294901760
      %531 = vmatpush2.xpose.msra.mxu0 %v530
      %532 = vmatprep.subr.mxu0 0.0
      %v533 = vand.u32 %v416, 4294901760
      %534 = vmatpush2.xpose.msra.mxu0 %v533
      %535 = vmatprep.subr.mxu0 0.0
      %v536 = vand.u32 %v413, 4294901760
      %537 = vmatpush2.xpose.msra.mxu0 %v536
      %538 = vmatprep.subr.mxu0 0.0
      %v539 = vand.u32 %v410, 4294901760
      %540 = vmatpush2.xpose.msra.mxu0 %v539
      %541 = vmatprep.subr.mxu0 0.0
      %v542 = vand.u32 %v407, 4294901760
      %543 = vmatpush2.xpose.msra.mxu0 %v542
      %544 = vmatprep.subr.mxu0 0.0
      %v545 = vand.u32 %v404, 4294901760
      %546 = vmatpush2.xpose.msra.mxu0 %v545
      %547 = vmatprep.mubr.f32.mxu0 0.0
      %v548 = vand.u32 %v344, 4294901760
      %v549 = vsub.f32 %v344, %v548
      %v550 = vand.u32 %v549, 4294901760
      %v551 = vsub.f32 %v549, %v550
      %v552 = vand.u32 %v551, 4294901760
      %553 = vmatmul.mubr.f32.gmra.mxu0 %v552
      %v554 = vpop.f32.mrf.mxu0
      %v555 = vadd.f32 %v325, %v554
      %v556 = vpop.f32.mrf.mxu0
      %v557 = vadd.f32 %v325, %v556
      %558 = vmatprep.mubr.f32.mxu0 0.0
      %v559 = vand.u32 %v347, 4294901760
      %v560 = vsub.f32 %v347, %v559
      %v561 = vand.u32 %v560, 4294901760
      %v562 = vsub.f32 %v560, %v561
      %v563 = vand.u32 %v562, 4294901760
      %564 = vmatmul.mubr.f32.gmra.mxu0 %v563
      %v565 = vpop.f32.mrf.mxu0
      %v566 = vadd.f32 %v330, %v565
      %v567 = vpop.f32.mrf.mxu0
      %v568 = vadd.f32 %v330, %v567
      %569 = vmatprep.mubr.f32.mxu0 0.0
      %v570 = vand.u32 %v350, 4294901760
      %v571 = vsub.f32 %v350, %v570
      %v572 = vand.u32 %v571, 4294901760
      %v573 = vsub.f32 %v571, %v572
      %v574 = vand.u32 %v573, 4294901760
      %575 = vmatmul.mubr.f32.gmra.mxu0 %v574
      %v576 = vpop.f32.mrf.mxu0
      %v577 = vadd.f32 %v335, %v576
      %v578 = vpop.f32.mrf.mxu0
      %v579 = vadd.f32 %v335, %v578
      %580 = vmatprep.mubr.f32.mxu0 0.0
      %v581 = vand.u32 %v353, 4294901760
      %v582 = vsub.f32 %v353, %v581
      %v583 = vand.u32 %v582, 4294901760
      %v584 = vsub.f32 %v582, %v583
      %v585 = vand.u32 %v584, 4294901760
      %586 = vmatmul.mubr.f32.gmra.mxu0 %v585
      %v587 = vpop.f32.mrf.mxu0
      %v588 = vadd.f32 %v340, %v587
      %v589 = vpop.f32.mrf.mxu0
      %v590 = vadd.f32 %v340, %v589
      %591 = vdwg.mxu0
      %592 = vmatprep.subr.mxu0 0.0
      %v593 = vand.u32 %v401, 4294901760
      %v594 = vsub.f32 %v401, %v593
      %v595 = vand.u32 %v594, 4294901760
      %v596 = vsub.f32 %v594, %v595
      %v597 = vand.u32 %v596, 4294901760
      %598 = vmatpush1.xpose.msra.mxu0 %v597
      %599 = vmatprep.subr.mxu0 0.0
      %v600 = vand.u32 %v398, 4294901760
      %v601 = vsub.f32 %v398, %v600
      %v602 = vand.u32 %v601, 4294901760
      %v603 = vsub.f32 %v601, %v602
      %v604 = vand.u32 %v603, 4294901760
      %605 = vmatpush1.xpose.msra.mxu0 %v604
      %606 = vmatprep.subr.mxu0 0.0
      %v607 = vand.u32 %v395, 4294901760
      %v608 = vsub.f32 %v395, %v607
      %v609 = vand.u32 %v608, 4294901760
      %v610 = vsub.f32 %v608, %v609
      %v611 = vand.u32 %v610, 4294901760
      %612 = vmatpush1.xpose.msra.mxu0 %v611
      %613 = vmatprep.subr.mxu0 0.0
      %v614 = vand.u32 %v392, 4294901760
      %v615 = vsub.f32 %v392, %v614
      %v616 = vand.u32 %v615, 4294901760
      %v617 = vsub.f32 %v615, %v616
      %v618 = vand.u32 %v617, 4294901760
      %619 = vmatpush1.xpose.msra.mxu0 %v618
      %620 = vmatprep.subr.mxu0 0.0
      %v621 = vand.u32 %v389, 4294901760
      %v622 = vsub.f32 %v389, %v621
      %v623 = vand.u32 %v622, 4294901760
      %v624 = vsub.f32 %v622, %v623
      %v625 = vand.u32 %v624, 4294901760
      %626 = vmatpush1.xpose.msra.mxu0 %v625
      %627 = vmatprep.subr.mxu0 0.0
      %v628 = vand.u32 %v386, 4294901760
      %v629 = vsub.f32 %v386, %v628
      %v630 = vand.u32 %v629, 4294901760
      %v631 = vsub.f32 %v629, %v630
      %v632 = vand.u32 %v631, 4294901760
      %633 = vmatpush1.xpose.msra.mxu0 %v632
      %634 = vmatprep.subr.mxu0 0.0
      %v635 = vand.u32 %v383, 4294901760
      %v636 = vsub.f32 %v383, %v635
      %v637 = vand.u32 %v636, 4294901760
      %v638 = vsub.f32 %v636, %v637
      %v639 = vand.u32 %v638, 4294901760
      %640 = vmatpush1.xpose.msra.mxu0 %v639
      %641 = vmatprep.subr.mxu0 0.0
      %v642 = vand.u32 %v380, 4294901760
      %v643 = vsub.f32 %v380, %v642
      %v644 = vand.u32 %v643, 4294901760
      %v645 = vsub.f32 %v643, %v644
      %v646 = vand.u32 %v645, 4294901760
      %647 = vmatpush1.xpose.msra.mxu0 %v646
      %648 = vmatprep.subr.mxu0 0.0
      %v649 = vand.u32 %v377, 4294901760
      %v650 = vsub.f32 %v377, %v649
      %v651 = vand.u32 %v650, 4294901760
      %v652 = vsub.f32 %v650, %v651
      %v653 = vand.u32 %v652, 4294901760
      %654 = vmatpush1.xpose.msra.mxu0 %v653
      %655 = vmatprep.subr.mxu0 0.0
      %v656 = vand.u32 %v374, 4294901760
      %v657 = vsub.f32 %v374, %v656
      %v658 = vand.u32 %v657, 4294901760
      %v659 = vsub.f32 %v657, %v658
      %v660 = vand.u32 %v659, 4294901760
      %661 = vmatpush1.xpose.msra.mxu0 %v660
      %662 = vmatprep.subr.mxu0 0.0
      %v663 = vand.u32 %v371, 4294901760
      %v664 = vsub.f32 %v371, %v663
      %v665 = vand.u32 %v664, 4294901760
      %v666 = vsub.f32 %v664, %v665
      %v667 = vand.u32 %v666, 4294901760
      %668 = vmatpush1.xpose.msra.mxu0 %v667
      %669 = vmatprep.subr.mxu0 0.0
      %v670 = vand.u32 %v368, 4294901760
      %v671 = vsub.f32 %v368, %v670
      %v672 = vand.u32 %v671, 4294901760
      %v673 = vsub.f32 %v671, %v672
      %v674 = vand.u32 %v673, 4294901760
      %675 = vmatpush1.xpose.msra.mxu0 %v674
      %676 = vmatprep.subr.mxu0 0.0
      %v677 = vand.u32 %v365, 4294901760
      %v678 = vsub.f32 %v365, %v677
      %v679 = vand.u32 %v678, 4294901760
      %v680 = vsub.f32 %v678, %v679
      %v681 = vand.u32 %v680, 4294901760
      %682 = vmatpush1.xpose.msra.mxu0 %v681
      %683 = vmatprep.subr.mxu0 0.0
      %v684 = vand.u32 %v362, 4294901760
      %v685 = vsub.f32 %v362, %v684
      %v686 = vand.u32 %v685, 4294901760
      %v687 = vsub.f32 %v685, %v686
      %v688 = vand.u32 %v687, 4294901760
      %689 = vmatpush1.xpose.msra.mxu0 %v688
      %690 = vmatprep.subr.mxu0 0.0
      %v691 = vand.u32 %v359, 4294901760
      %v692 = vsub.f32 %v359, %v691
      %v693 = vand.u32 %v692, 4294901760
      %v694 = vsub.f32 %v692, %v693
      %v695 = vand.u32 %v694, 4294901760
      %696 = vmatpush1.xpose.msra.mxu0 %v695
      %697 = vmatprep.subr.mxu0 0.0
      %v698 = vand.u32 %v356, 4294901760
      %v699 = vsub.f32 %v356, %v698
      %v700 = vand.u32 %v699, 4294901760
      %v701 = vsub.f32 %v699, %v700
      %v702 = vand.u32 %v701, 4294901760
      %703 = vmatpush1.xpose.msra.mxu0 %v702
      %704 = vmatprep.subr.mxu0 0.0
      %v705 = vand.u32 %v449, 4294901760
      %v706 = vsub.f32 %v449, %v705
      %v707 = vand.u32 %v706, 4294901760
      %v708 = vsub.f32 %v706, %v707
      %v709 = vand.u32 %v708, 4294901760
      %710 = vmatpush2.xpose.msra.mxu0 %v709
      %711 = vmatprep.subr.mxu0 0.0
      %v712 = vand.u32 %v446, 4294901760
      %v713 = vsub.f32 %v446, %v712
      %v714 = vand.u32 %v713, 4294901760
      %v715 = vsub.f32 %v713, %v714
      %v716 = vand.u32 %v715, 4294901760
      %717 = vmatpush2.xpose.msra.mxu0 %v716
      %718 = vmatprep.subr.mxu0 0.0
      %v719 = vand.u32 %v443, 4294901760
      %v720 = vsub.f32 %v443, %v719
      %v721 = vand.u32 %v720, 4294901760
      %v722 = vsub.f32 %v720, %v721
      %v723 = vand.u32 %v722, 4294901760
      %724 = vmatpush2.xpose.msra.mxu0 %v723
      %725 = vmatprep.subr.mxu0 0.0
      %v726 = vand.u32 %v440, 4294901760
      %v727 = vsub.f32 %v440, %v726
      %v728 = vand.u32 %v727, 4294901760
      %v729 = vsub.f32 %v727, %v728
      %v730 = vand.u32 %v729, 4294901760
      %731 = vmatpush2.xpose.msra.mxu0 %v730
      %732 = vmatprep.subr.mxu0 0.0
      %v733 = vand.u32 %v437, 4294901760
      %v734 = vsub.f32 %v437, %v733
      %v735 = vand.u32 %v734, 4294901760
      %v736 = vsub.f32 %v734, %v735
      %v737 = vand.u32 %v736, 4294901760
      %738 = vmatpush2.xpose.msra.mxu0 %v737
      %739 = vmatprep.subr.mxu0 0.0
      %v740 = vand.u32 %v434, 4294901760
      %v741 = vsub.f32 %v434, %v740
      %v742 = vand.u32 %v741, 4294901760
      %v743 = vsub.f32 %v741, %v742
      %v744 = vand.u32 %v743, 4294901760
      %745 = vmatpush2.xpose.msra.mxu0 %v744
      %746 = vmatprep.subr.mxu0 0.0
      %v747 = vand.u32 %v431, 4294901760
      %v748 = vsub.f32 %v431, %v747
      %v749 = vand.u32 %v748, 4294901760
      %v750 = vsub.f32 %v748, %v749
      %v751 = vand.u32 %v750, 4294901760
      %752 = vmatpush2.xpose.msra.mxu0 %v751
      %753 = vmatprep.subr.mxu0 0.0
      %v754 = vand.u32 %v428, 4294901760
      %v755 = vsub.f32 %v428, %v754
      %v756 = vand.u32 %v755, 4294901760
      %v757 = vsub.f32 %v755, %v756
      %v758 = vand.u32 %v757, 4294901760
      %759 = vmatpush2.xpose.msra.mxu0 %v758
      %760 = vmatprep.subr.mxu0 0.0
      %v761 = vand.u32 %v425, 4294901760
      %v762 = vsub.f32 %v425, %v761
      %v763 = vand.u32 %v762, 4294901760
      %v764 = vsub.f32 %v762, %v763
      %v765 = vand.u32 %v764, 4294901760
      %766 = vmatpush2.xpose.msra.mxu0 %v765
      %767 = vmatprep.subr.mxu0 0.0
      %v768 = vand.u32 %v422, 4294901760
      %v769 = vsub.f32 %v422, %v768
      %v770 = vand.u32 %v769, 4294901760
      %v771 = vsub.f32 %v769, %v770
      %v772 = vand.u32 %v771, 4294901760
      %773 = vmatpush2.xpose.msra.mxu0 %v772
      %774 = vmatprep.subr.mxu0 0.0
      %v775 = vand.u32 %v419, 4294901760
      %v776 = vsub.f32 %v419, %v775
      %v777 = vand.u32 %v776, 4294901760
      %v778 = vsub.f32 %v776, %v777
      %v779 = vand.u32 %v778, 4294901760
      %780 = vmatpush2.xpose.msra.mxu0 %v779
      %781 = vmatprep.subr.mxu0 0.0
      %v782 = vand.u32 %v416, 4294901760
      %v783 = vsub.f32 %v416, %v782
      %v784 = vand.u32 %v783, 4294901760
      %v785 = vsub.f32 %v783, %v784
      %v786 = vand.u32 %v785, 4294901760
      %787 = vmatpush2.xpose.msra.mxu0 %v786
      %788 = vmatprep.subr.mxu0 0.0
      %v789 = vand.u32 %v413, 4294901760
      %v790 = vsub.f32 %v413, %v789
      %v791 = vand.u32 %v790, 4294901760
      %v792 = vsub.f32 %v790, %v791
      %v793 = vand.u32 %v792, 4294901760
      %794 = vmatpush2.xpose.msra.mxu0 %v793
      %795 = vmatprep.subr.mxu0 0.0
      %v796 = vand.u32 %v410, 4294901760
      %v797 = vsub.f32 %v410, %v796
      %v798 = vand.u32 %v797, 4294901760
      %v799 = vsub.f32 %v797, %v798
      %v800 = vand.u32 %v799, 4294901760
      %801 = vmatpush2.xpose.msra.mxu0 %v800
      %802 = vmatprep.subr.mxu0 0.0
      %v803 = vand.u32 %v407, 4294901760
      %v804 = vsub.f32 %v407, %v803
      %v805 = vand.u32 %v804, 4294901760
      %v806 = vsub.f32 %v804, %v805
      %v807 = vand.u32 %v806, 4294901760
      %808 = vmatpush2.xpose.msra.mxu0 %v807
      %809 = vmatprep.subr.mxu0 0.0
      %v810 = vand.u32 %v404, 4294901760
      %v811 = vsub.f32 %v404, %v810
      %v812 = vand.u32 %v811, 4294901760
      %v813 = vsub.f32 %v811, %v812
      %v814 = vand.u32 %v813, 4294901760
      %815 = vmatpush2.xpose.msra.mxu0 %v814
      %816 = vmatprep.mubr.f32.mxu0 0.0
      %v817 = vand.u32 %v344, 4294901760
      %818 = vmatmul.mubr.f32.gmra.mxu0 %v817
      %v819 = vpop.f32.mrf.mxu0
      %v820 = vadd.f32 %v555, %v819
      %v821 = vpop.f32.mrf.mxu0
      %v822 = vadd.f32 %v557, %v821
      %823 = vmatprep.mubr.f32.mxu0 0.0
      %v824 = vand.u32 %v347, 4294901760
      %825 = vmatmul.mubr.f32.gmra.mxu0 %v824
      %v826 = vpop.f32.mrf.mxu0
      %v827 = vadd.f32 %v566, %v826
      %v828 = vpop.f32.mrf.mxu0
      %v829 = vadd.f32 %v568, %v828
      %830 = vmatprep.mubr.f32.mxu0 0.0
      %v831 = vand.u32 %v350, 4294901760
      %832 = vmatmul.mubr.f32.gmra.mxu0 %v831
      %v833 = vpop.f32.mrf.mxu0
      %v834 = vadd.f32 %v577, %v833
      %v835 = vpop.f32.mrf.mxu0
      %v836 = vadd.f32 %v579, %v835
      %837 = vmatprep.mubr.f32.mxu0 0.0
      %v838 = vand.u32 %v353, 4294901760
      %839 = vmatmul.mubr.f32.gmra.mxu0 %v838
      %v840 = vpop.f32.mrf.mxu0
      %v841 = vadd.f32 %v588, %v840
      %v842 = vpop.f32.mrf.mxu0
      %v843 = vadd.f32 %v590, %v842
      %844 = vdwg.mxu0
      %845 = vmatprep.subr.mxu0 0.0
      %v846 = vand.u32 %v401, 4294901760
      %v847 = vsub.f32 %v401, %v846
      %848 = vmatpush1.xpose.msra.mxu0 %v847
      %849 = vmatprep.subr.mxu0 0.0
      %v850 = vand.u32 %v398, 4294901760
      %v851 = vsub.f32 %v398, %v850
      %852 = vmatpush1.xpose.msra.mxu0 %v851
      %853 = vmatprep.subr.mxu0 0.0
      %v854 = vand.u32 %v395, 4294901760
      %v855 = vsub.f32 %v395, %v854
      %856 = vmatpush1.xpose.msra.mxu0 %v855
      %857 = vmatprep.subr.mxu0 0.0
      %v858 = vand.u32 %v392, 4294901760
      %v859 = vsub.f32 %v392, %v858
      %860 = vmatpush1.xpose.msra.mxu0 %v859
      %861 = vmatprep.subr.mxu0 0.0
      %v862 = vand.u32 %v389, 4294901760
      %v863 = vsub.f32 %v389, %v862
      %864 = vmatpush1.xpose.msra.mxu0 %v863
      %865 = vmatprep.subr.mxu0 0.0
      %v866 = vand.u32 %v386, 4294901760
      %v867 = vsub.f32 %v386, %v866
      %868 = vmatpush1.xpose.msra.mxu0 %v867
      %869 = vmatprep.subr.mxu0 0.0
      %v870 = vand.u32 %v383, 4294901760
      %v871 = vsub.f32 %v383, %v870
      %872 = vmatpush1.xpose.msra.mxu0 %v871
      %873 = vmatprep.subr.mxu0 0.0
      %v874 = vand.u32 %v380, 4294901760
      %v875 = vsub.f32 %v380, %v874
      %876 = vmatpush1.xpose.msra.mxu0 %v875
      %877 = vmatprep.subr.mxu0 0.0
      %v878 = vand.u32 %v377, 4294901760
      %v879 = vsub.f32 %v377, %v878
      %880 = vmatpush1.xpose.msra.mxu0 %v879
      %881 = vmatprep.subr.mxu0 0.0
      %v882 = vand.u32 %v374, 4294901760
      %v883 = vsub.f32 %v374, %v882
      %884 = vmatpush1.xpose.msra.mxu0 %v883
      %885 = vmatprep.subr.mxu0 0.0
      %v886 = vand.u32 %v371, 4294901760
      %v887 = vsub.f32 %v371, %v886
      %888 = vmatpush1.xpose.msra.mxu0 %v887
      %889 = vmatprep.subr.mxu0 0.0
      %v890 = vand.u32 %v368, 4294901760
      %v891 = vsub.f32 %v368, %v890
      %892 = vmatpush1.xpose.msra.mxu0 %v891
      %893 = vmatprep.subr.mxu0 0.0
      %v894 = vand.u32 %v365, 4294901760
      %v895 = vsub.f32 %v365, %v894
      %896 = vmatpush1.xpose.msra.mxu0 %v895
      %897 = vmatprep.subr.mxu0 0.0
      %v898 = vand.u32 %v362, 4294901760
      %v899 = vsub.f32 %v362, %v898
      %900 = vmatpush1.xpose.msra.mxu0 %v899
      %901 = vmatprep.subr.mxu0 0.0
      %v902 = vand.u32 %v359, 4294901760
      %v903 = vsub.f32 %v359, %v902
      %904 = vmatpush1.xpose.msra.mxu0 %v903
      %905 = vmatprep.subr.mxu0 0.0
      %v906 = vand.u32 %v356, 4294901760
      %v907 = vsub.f32 %v356, %v906
      %908 = vmatpush1.xpose.msra.mxu0 %v907
      %909 = vmatprep.subr.mxu0 0.0
      %v910 = vand.u32 %v449, 4294901760
      %v911 = vsub.f32 %v449, %v910
      %912 = vmatpush2.xpose.msra.mxu0 %v911
      %913 = vmatprep.subr.mxu0 0.0
      %v914 = vand.u32 %v446, 4294901760
      %v915 = vsub.f32 %v446, %v914
      %916 = vmatpush2.xpose.msra.mxu0 %v915
      %917 = vmatprep.subr.mxu0 0.0
      %v918 = vand.u32 %v443, 4294901760
      %v919 = vsub.f32 %v443, %v918
      %920 = vmatpush2.xpose.msra.mxu0 %v919
      %921 = vmatprep.subr.mxu0 0.0
      %v922 = vand.u32 %v440, 4294901760
      %v923 = vsub.f32 %v440, %v922
      %924 = vmatpush2.xpose.msra.mxu0 %v923
      %925 = vmatprep.subr.mxu0 0.0
      %v926 = vand.u32 %v437, 4294901760
      %v927 = vsub.f32 %v437, %v926
      %928 = vmatpush2.xpose.msra.mxu0 %v927
      %929 = vmatprep.subr.mxu0 0.0
      %v930 = vand.u32 %v434, 4294901760
      %v931 = vsub.f32 %v434, %v930
      %932 = vmatpush2.xpose.msra.mxu0 %v931
      %933 = vmatprep.subr.mxu0 0.0
      %v934 = vand.u32 %v431, 4294901760
      %v935 = vsub.f32 %v431, %v934
      %936 = vmatpush2.xpose.msra.mxu0 %v935
      %937 = vmatprep.subr.mxu0 0.0
      %v938 = vand.u32 %v428, 4294901760
      %v939 = vsub.f32 %v428, %v938
      %940 = vmatpush2.xpose.msra.mxu0 %v939
      %941 = vmatprep.subr.mxu0 0.0
      %v942 = vand.u32 %v425, 4294901760
      %v943 = vsub.f32 %v425, %v942
      %944 = vmatpush2.xpose.msra.mxu0 %v943
      %945 = vmatprep.subr.mxu0 0.0
      %v946 = vand.u32 %v422, 4294901760
      %v947 = vsub.f32 %v422, %v946
      %948 = vmatpush2.xpose.msra.mxu0 %v947
      %949 = vmatprep.subr.mxu0 0.0
      %v950 = vand.u32 %v419, 4294901760
      %v951 = vsub.f32 %v419, %v950
      %952 = vmatpush2.xpose.msra.mxu0 %v951
      %953 = vmatprep.subr.mxu0 0.0
      %v954 = vand.u32 %v416, 4294901760
      %v955 = vsub.f32 %v416, %v954
      %956 = vmatpush2.xpose.msra.mxu0 %v955
      %957 = vmatprep.subr.mxu0 0.0
      %v958 = vand.u32 %v413, 4294901760
      %v959 = vsub.f32 %v413, %v958
      %960 = vmatpush2.xpose.msra.mxu0 %v959
      %961 = vmatprep.subr.mxu0 0.0
      %v962 = vand.u32 %v410, 4294901760
      %v963 = vsub.f32 %v410, %v962
      %964 = vmatpush2.xpose.msra.mxu0 %v963
      %965 = vmatprep.subr.mxu0 0.0
      %v966 = vand.u32 %v407, 4294901760
      %v967 = vsub.f32 %v407, %v966
      %968 = vmatpush2.xpose.msra.mxu0 %v967
      %969 = vmatprep.subr.mxu0 0.0
      %v970 = vand.u32 %v404, 4294901760
      %v971 = vsub.f32 %v404, %v970
      %972 = vmatpush2.xpose.msra.mxu0 %v971
      %973 = vmatprep.mubr.f32.mxu0 0.0
      %v974 = vand.u32 %v344, 4294901760
      %v975 = vsub.f32 %v344, %v974
      %976 = vmatmul.mubr.f32.gmra.mxu0 %v975
      %v977 = vpop.f32.mrf.mxu0
      %v978 = vadd.f32 %v820, %v977
      %v979 = vpop.f32.mrf.mxu0
      %v980 = vadd.f32 %v822, %v979
      %981 = vmatprep.mubr.f32.mxu0 0.0
      %v982 = vand.u32 %v347, 4294901760
      %v983 = vsub.f32 %v347, %v982
      %984 = vmatmul.mubr.f32.gmra.mxu0 %v983
      %v985 = vpop.f32.mrf.mxu0
      %v986 = vadd.f32 %v827, %v985
      %v987 = vpop.f32.mrf.mxu0
      %v988 = vadd.f32 %v829, %v987
      %989 = vmatprep.mubr.f32.mxu0 0.0
      %v990 = vand.u32 %v350, 4294901760
      %v991 = vsub.f32 %v350, %v990
      %992 = vmatmul.mubr.f32.gmra.mxu0 %v991
      %v993 = vpop.f32.mrf.mxu0
      %v994 = vadd.f32 %v834, %v993
      %v995 = vpop.f32.mrf.mxu0
      %v996 = vadd.f32 %v836, %v995
      %997 = vmatprep.mubr.f32.mxu0 0.0
      %v998 = vand.u32 %v353, 4294901760
      %v999 = vsub.f32 %v353, %v998
      %1000 = vmatmul.mubr.f32.gmra.mxu0 %v999
      %v1001 = vpop.f32.mrf.mxu0
      %v1002 = vadd.f32 %v841, %v1001
      %v1003 = vpop.f32.mrf.mxu0
      %v1004 = vadd.f32 %v843, %v1003
      %1005 = vdwg.mxu0
      %1006 = vmatprep.subr.mxu0 0.0
      %v1007 = vand.u32 %v401, 4294901760
      %1008 = vmatpush1.xpose.msra.mxu0 %v1007
      %1009 = vmatprep.subr.mxu0 0.0
      %v1010 = vand.u32 %v398, 4294901760
      %1011 = vmatpush1.xpose.msra.mxu0 %v1010
      %1012 = vmatprep.subr.mxu0 0.0
      %v1013 = vand.u32 %v395, 4294901760
      %1014 = vmatpush1.xpose.msra.mxu0 %v1013
      %1015 = vmatprep.subr.mxu0 0.0
      %v1016 = vand.u32 %v392, 4294901760
      %1017 = vmatpush1.xpose.msra.mxu0 %v1016
      %1018 = vmatprep.subr.mxu0 0.0
      %v1019 = vand.u32 %v389, 4294901760
      %1020 = vmatpush1.xpose.msra.mxu0 %v1019
      %1021 = vmatprep.subr.mxu0 0.0
      %v1022 = vand.u32 %v386, 4294901760
      %1023 = vmatpush1.xpose.msra.mxu0 %v1022
      %1024 = vmatprep.subr.mxu0 0.0
      %v1025 = vand.u32 %v383, 4294901760
      %1026 = vmatpush1.xpose.msra.mxu0 %v1025
      %1027 = vmatprep.subr.mxu0 0.0
      %v1028 = vand.u32 %v380, 4294901760
      %1029 = vmatpush1.xpose.msra.mxu0 %v1028
      %1030 = vmatprep.subr.mxu0 0.0
      %v1031 = vand.u32 %v377, 4294901760
      %1032 = vmatpush1.xpose.msra.mxu0 %v1031
      %1033 = vmatprep.subr.mxu0 0.0
      %v1034 = vand.u32 %v374, 4294901760
      %1035 = vmatpush1.xpose.msra.mxu0 %v1034
      %1036 = vmatprep.subr.mxu0 0.0
      %v1037 = vand.u32 %v371, 4294901760
      %1038 = vmatpush1.xpose.msra.mxu0 %v1037
      %1039 = vmatprep.subr.mxu0 0.0
      %v1040 = vand.u32 %v368, 4294901760
      %1041 = vmatpush1.xpose.msra.mxu0 %v1040
      %1042 = vmatprep.subr.mxu0 0.0
      %v1043 = vand.u32 %v365, 4294901760
      %1044 = vmatpush1.xpose.msra.mxu0 %v1043
      %1045 = vmatprep.subr.mxu0 0.0
      %v1046 = vand.u32 %v362, 4294901760
      %1047 = vmatpush1.xpose.msra.mxu0 %v1046
      %1048 = vmatprep.subr.mxu0 0.0
      %v1049 = vand.u32 %v359, 4294901760
      %1050 = vmatpush1.xpose.msra.mxu0 %v1049
      %1051 = vmatprep.subr.mxu0 0.0
      %v1052 = vand.u32 %v356, 4294901760
      %1053 = vmatpush1.xpose.msra.mxu0 %v1052
      %1054 = vmatprep.subr.mxu0 0.0
      %v1055 = vand.u32 %v449, 4294901760
      %1056 = vmatpush2.xpose.msra.mxu0 %v1055
      %1057 = vmatprep.subr.mxu0 0.0
      %v1058 = vand.u32 %v446, 4294901760
      %1059 = vmatpush2.xpose.msra.mxu0 %v1058
      %1060 = vmatprep.subr.mxu0 0.0
      %v1061 = vand.u32 %v443, 4294901760
      %1062 = vmatpush2.xpose.msra.mxu0 %v1061
      %1063 = vmatprep.subr.mxu0 0.0
      %v1064 = vand.u32 %v440, 4294901760
      %1065 = vmatpush2.xpose.msra.mxu0 %v1064
      %1066 = vmatprep.subr.mxu0 0.0
      %v1067 = vand.u32 %v437, 4294901760
      %1068 = vmatpush2.xpose.msra.mxu0 %v1067
      %1069 = vmatprep.subr.mxu0 0.0
      %v1070 = vand.u32 %v434, 4294901760
      %1071 = vmatpush2.xpose.msra.mxu0 %v1070
      %1072 = vmatprep.subr.mxu0 0.0
      %v1073 = vand.u32 %v431, 4294901760
      %1074 = vmatpush2.xpose.msra.mxu0 %v1073
      %1075 = vmatprep.subr.mxu0 0.0
      %v1076 = vand.u32 %v428, 4294901760
      %1077 = vmatpush2.xpose.msra.mxu0 %v1076
      %1078 = vmatprep.subr.mxu0 0.0
      %v1079 = vand.u32 %v425, 4294901760
      %1080 = vmatpush2.xpose.msra.mxu0 %v1079
      %1081 = vmatprep.subr.mxu0 0.0
      %v1082 = vand.u32 %v422, 4294901760
      %1083 = vmatpush2.xpose.msra.mxu0 %v1082
      %1084 = vmatprep.subr.mxu0 0.0
      %v1085 = vand.u32 %v419, 4294901760
      %1086 = vmatpush2.xpose.msra.mxu0 %v1085
      %1087 = vmatprep.subr.mxu0 0.0
      %v1088 = vand.u32 %v416, 4294901760
      %1089 = vmatpush2.xpose.msra.mxu0 %v1088
      %1090 = vmatprep.subr.mxu0 0.0
      %v1091 = vand.u32 %v413, 4294901760
      %1092 = vmatpush2.xpose.msra.mxu0 %v1091
      %1093 = vmatprep.subr.mxu0 0.0
      %v1094 = vand.u32 %v410, 4294901760
      %1095 = vmatpush2.xpose.msra.mxu0 %v1094
      %1096 = vmatprep.subr.mxu0 0.0
      %v1097 = vand.u32 %v407, 4294901760
      %1098 = vmatpush2.xpose.msra.mxu0 %v1097
      %1099 = vmatprep.subr.mxu0 0.0
      %v1100 = vand.u32 %v404, 4294901760
      %1101 = vmatpush2.xpose.msra.mxu0 %v1100
      %1102 = vmatprep.mubr.f32.mxu0 0.0
      %v1103 = vand.u32 %v344, 4294901760
      %v1104 = vsub.f32 %v344, %v1103
      %v1105 = vand.u32 %v1104, 4294901760
      %1106 = vmatmul.mubr.f32.gmra.mxu0 %v1105
      %v1107 = vpop.f32.mrf.mxu0
      %v1108 = vadd.f32 %v978, %v1107
      %v1109 = vpop.f32.mrf.mxu0
      %v1110 = vadd.f32 %v980, %v1109
      %1111 = vmatprep.mubr.f32.mxu0 0.0
      %v1112 = vand.u32 %v347, 4294901760
      %v1113 = vsub.f32 %v347, %v1112
      %v1114 = vand.u32 %v1113, 4294901760
      %1115 = vmatmul.mubr.f32.gmra.mxu0 %v1114
      %v1116 = vpop.f32.mrf.mxu0
      %v1117 = vadd.f32 %v986, %v1116
      %v1118 = vpop.f32.mrf.mxu0
      %v1119 = vadd.f32 %v988, %v1118
      %1120 = vmatprep.mubr.f32.mxu0 0.0
      %v1121 = vand.u32 %v350, 4294901760
      %v1122 = vsub.f32 %v350, %v1121
      %v1123 = vand.u32 %v1122, 4294901760
      %1124 = vmatmul.mubr.f32.gmra.mxu0 %v1123
      %v1125 = vpop.f32.mrf.mxu0
      %v1126 = vadd.f32 %v994, %v1125
      %v1127 = vpop.f32.mrf.mxu0
      %v1128 = vadd.f32 %v996, %v1127
      %1129 = vmatprep.mubr.f32.mxu0 0.0
      %v1130 = vand.u32 %v353, 4294901760
      %v1131 = vsub.f32 %v353, %v1130
      %v1132 = vand.u32 %v1131, 4294901760
      %1133 = vmatmul.mubr.f32.gmra.mxu0 %v1132
      %v1134 = vpop.f32.mrf.mxu0
      %v1135 = vadd.f32 %v1002, %v1134
      %v1136 = vpop.f32.mrf.mxu0
      %v1137 = vadd.f32 %v1004, %v1136
      %1138 = vdwg.mxu0
      %1139 = vmatprep.subr.mxu0 0.0
      %v1140 = vand.u32 %v401, 4294901760
      %v1141 = vsub.f32 %v401, %v1140
      %v1142 = vand.u32 %v1141, 4294901760
      %1143 = vmatpush1.xpose.msra.mxu0 %v1142
      %1144 = vmatprep.subr.mxu0 0.0
      %v1145 = vand.u32 %v398, 4294901760
      %v1146 = vsub.f32 %v398, %v1145
      %v1147 = vand.u32 %v1146, 4294901760
      %1148 = vmatpush1.xpose.msra.mxu0 %v1147
      %1149 = vmatprep.subr.mxu0 0.0
      %v1150 = vand.u32 %v395, 4294901760
      %v1151 = vsub.f32 %v395, %v1150
      %v1152 = vand.u32 %v1151, 4294901760
      %1153 = vmatpush1.xpose.msra.mxu0 %v1152
      %1154 = vmatprep.subr.mxu0 0.0
      %v1155 = vand.u32 %v392, 4294901760
      %v1156 = vsub.f32 %v392, %v1155
      %v1157 = vand.u32 %v1156, 4294901760
      %1158 = vmatpush1.xpose.msra.mxu0 %v1157
      %1159 = vmatprep.subr.mxu0 0.0
      %v1160 = vand.u32 %v389, 4294901760
      %v1161 = vsub.f32 %v389, %v1160
      %v1162 = vand.u32 %v1161, 4294901760
      %1163 = vmatpush1.xpose.msra.mxu0 %v1162
      %1164 = vmatprep.subr.mxu0 0.0
      %v1165 = vand.u32 %v386, 4294901760
      %v1166 = vsub.f32 %v386, %v1165
      %v1167 = vand.u32 %v1166, 4294901760
      %1168 = vmatpush1.xpose.msra.mxu0 %v1167
      %1169 = vmatprep.subr.mxu0 0.0
      %v1170 = vand.u32 %v383, 4294901760
      %v1171 = vsub.f32 %v383, %v1170
      %v1172 = vand.u32 %v1171, 4294901760
      %1173 = vmatpush1.xpose.msra.mxu0 %v1172
      %1174 = vmatprep.subr.mxu0 0.0
      %v1175 = vand.u32 %v380, 4294901760
      %v1176 = vsub.f32 %v380, %v1175
      %v1177 = vand.u32 %v1176, 4294901760
      %1178 = vmatpush1.xpose.msra.mxu0 %v1177
      %1179 = vmatprep.subr.mxu0 0.0
      %v1180 = vand.u32 %v377, 4294901760
      %v1181 = vsub.f32 %v377, %v1180
      %v1182 = vand.u32 %v1181, 4294901760
      %1183 = vmatpush1.xpose.msra.mxu0 %v1182
      %1184 = vmatprep.subr.mxu0 0.0
      %v1185 = vand.u32 %v374, 4294901760
      %v1186 = vsub.f32 %v374, %v1185
      %v1187 = vand.u32 %v1186, 4294901760
      %1188 = vmatpush1.xpose.msra.mxu0 %v1187
      %1189 = vmatprep.subr.mxu0 0.0
      %v1190 = vand.u32 %v371, 4294901760
      %v1191 = vsub.f32 %v371, %v1190
      %v1192 = vand.u32 %v1191, 4294901760
      %1193 = vmatpush1.xpose.msra.mxu0 %v1192
      %1194 = vmatprep.subr.mxu0 0.0
      %v1195 = vand.u32 %v368, 4294901760
      %v1196 = vsub.f32 %v368, %v1195
      %v1197 = vand.u32 %v1196, 4294901760
      %1198 = vmatpush1.xpose.msra.mxu0 %v1197
      %1199 = vmatprep.subr.mxu0 0.0
      %v1200 = vand.u32 %v365, 4294901760
      %v1201 = vsub.f32 %v365, %v1200
      %v1202 = vand.u32 %v1201, 4294901760
      %1203 = vmatpush1.xpose.msra.mxu0 %v1202
      %1204 = vmatprep.subr.mxu0 0.0
      %v1205 = vand.u32 %v362, 4294901760
      %v1206 = vsub.f32 %v362, %v1205
      %v1207 = vand.u32 %v1206, 4294901760
      %1208 = vmatpush1.xpose.msra.mxu0 %v1207
      %1209 = vmatprep.subr.mxu0 0.0
      %v1210 = vand.u32 %v359, 4294901760
      %v1211 = vsub.f32 %v359, %v1210
      %v1212 = vand.u32 %v1211, 4294901760
      %1213 = vmatpush1.xpose.msra.mxu0 %v1212
      %1214 = vmatprep.subr.mxu0 0.0
      %v1215 = vand.u32 %v356, 4294901760
      %v1216 = vsub.f32 %v356, %v1215
      %v1217 = vand.u32 %v1216, 4294901760
      %1218 = vmatpush1.xpose.msra.mxu0 %v1217
      %1219 = vmatprep.subr.mxu0 0.0
      %v1220 = vand.u32 %v449, 4294901760
      %v1221 = vsub.f32 %v449, %v1220
      %v1222 = vand.u32 %v1221, 4294901760
      %1223 = vmatpush2.xpose.msra.mxu0 %v1222
      %1224 = vmatprep.subr.mxu0 0.0
      %v1225 = vand.u32 %v446, 4294901760
      %v1226 = vsub.f32 %v446, %v1225
      %v1227 = vand.u32 %v1226, 4294901760
      %1228 = vmatpush2.xpose.msra.mxu0 %v1227
      %1229 = vmatprep.subr.mxu0 0.0
      %v1230 = vand.u32 %v443, 4294901760
      %v1231 = vsub.f32 %v443, %v1230
      %v1232 = vand.u32 %v1231, 4294901760
      %1233 = vmatpush2.xpose.msra.mxu0 %v1232
      %1234 = vmatprep.subr.mxu0 0.0
      %v1235 = vand.u32 %v440, 4294901760
      %v1236 = vsub.f32 %v440, %v1235
      %v1237 = vand.u32 %v1236, 4294901760
      %1238 = vmatpush2.xpose.msra.mxu0 %v1237
      %1239 = vmatprep.subr.mxu0 0.0
      %v1240 = vand.u32 %v437, 4294901760
      %v1241 = vsub.f32 %v437, %v1240
      %v1242 = vand.u32 %v1241, 4294901760
      %1243 = vmatpush2.xpose.msra.mxu0 %v1242
      %1244 = vmatprep.subr.mxu0 0.0
      %v1245 = vand.u32 %v434, 4294901760
      %v1246 = vsub.f32 %v434, %v1245
      %v1247 = vand.u32 %v1246, 4294901760
      %1248 = vmatpush2.xpose.msra.mxu0 %v1247
      %1249 = vmatprep.subr.mxu0 0.0
      %v1250 = vand.u32 %v431, 4294901760
      %v1251 = vsub.f32 %v431, %v1250
      %v1252 = vand.u32 %v1251, 4294901760
      %1253 = vmatpush2.xpose.msra.mxu0 %v1252
      %1254 = vmatprep.subr.mxu0 0.0
      %v1255 = vand.u32 %v428, 4294901760
      %v1256 = vsub.f32 %v428, %v1255
      %v1257 = vand.u32 %v1256, 4294901760
      %1258 = vmatpush2.xpose.msra.mxu0 %v1257
      %1259 = vmatprep.subr.mxu0 0.0
      %v1260 = vand.u32 %v425, 4294901760
      %v1261 = vsub.f32 %v425, %v1260
      %v1262 = vand.u32 %v1261, 4294901760
      %1263 = vmatpush2.xpose.msra.mxu0 %v1262
      %1264 = vmatprep.subr.mxu0 0.0
      %v1265 = vand.u32 %v422, 4294901760
      %v1266 = vsub.f32 %v422, %v1265
      %v1267 = vand.u32 %v1266, 4294901760
      %1268 = vmatpush2.xpose.msra.mxu0 %v1267
      %1269 = vmatprep.subr.mxu0 0.0
      %v1270 = vand.u32 %v419, 4294901760
      %v1271 = vsub.f32 %v419, %v1270
      %v1272 = vand.u32 %v1271, 4294901760
      %1273 = vmatpush2.xpose.msra.mxu0 %v1272
      %1274 = vmatprep.subr.mxu0 0.0
      %v1275 = vand.u32 %v416, 4294901760
      %v1276 = vsub.f32 %v416, %v1275
      %v1277 = vand.u32 %v1276, 4294901760
      %1278 = vmatpush2.xpose.msra.mxu0 %v1277
      %1279 = vmatprep.subr.mxu0 0.0
      %v1280 = vand.u32 %v413, 4294901760
      %v1281 = vsub.f32 %v413, %v1280
      %v1282 = vand.u32 %v1281, 4294901760
      %1283 = vmatpush2.xpose.msra.mxu0 %v1282
      %1284 = vmatprep.subr.mxu0 0.0
      %v1285 = vand.u32 %v410, 4294901760
      %v1286 = vsub.f32 %v410, %v1285
      %v1287 = vand.u32 %v1286, 4294901760
      %1288 = vmatpush2.xpose.msra.mxu0 %v1287
      %1289 = vmatprep.subr.mxu0 0.0
      %v1290 = vand.u32 %v407, 4294901760
      %v1291 = vsub.f32 %v407, %v1290
      %v1292 = vand.u32 %v1291, 4294901760
      %1293 = vmatpush2.xpose.msra.mxu0 %v1292
      %1294 = vmatprep.subr.mxu0 0.0
      %v1295 = vand.u32 %v404, 4294901760
      %v1296 = vsub.f32 %v404, %v1295
      %v1297 = vand.u32 %v1296, 4294901760
      %1298 = vmatpush2.xpose.msra.mxu0 %v1297
      %1299 = vmatprep.mubr.f32.mxu0 0.0
      %v1300 = vand.u32 %v344, 4294901760
      %1301 = vmatmul.mubr.f32.gmra.mxu0 %v1300
      %v1302 = vpop.f32.mrf.mxu0
      %v1303 = vadd.f32 %v1108, %v1302
      %v1304 = vpop.f32.mrf.mxu0
      %v1305 = vadd.f32 %v1110, %v1304
      %1306 = vmatprep.mubr.f32.mxu0 0.0
      %v1307 = vand.u32 %v347, 4294901760
      %1308 = vmatmul.mubr.f32.gmra.mxu0 %v1307
      %v1309 = vpop.f32.mrf.mxu0
      %v1310 = vadd.f32 %v1117, %v1309
      %v1311 = vpop.f32.mrf.mxu0
      %v1312 = vadd.f32 %v1119, %v1311
      %1313 = vmatprep.mubr.f32.mxu0 0.0
      %v1314 = vand.u32 %v350, 4294901760
      %1315 = vmatmul.mubr.f32.gmra.mxu0 %v1314
      %v1316 = vpop.f32.mrf.mxu0
      %v1317 = vadd.f32 %v1126, %v1316
      %v1318 = vpop.f32.mrf.mxu0
      %v1319 = vadd.f32 %v1128, %v1318
      %1320 = vmatprep.mubr.f32.mxu0 0.0
      %v1321 = vand.u32 %v353, 4294901760
      %1322 = vmatmul.mubr.f32.gmra.mxu0 %v1321
      %v1323 = vpop.f32.mrf.mxu0
      %v1324 = vadd.f32 %v1135, %v1323
      %v1325 = vpop.f32.mrf.mxu0
      %v1326 = vadd.f32 %v1137, %v1325
      %1327 = vdwg.mxu0
      %1328 = vmatprep.subr.mxu0 0.0
      %v1329 = vand.u32 %v401, 4294901760
      %1330 = vmatpush1.xpose.msra.mxu0 %v1329
      %1331 = vmatprep.subr.mxu0 0.0
      %v1332 = vand.u32 %v398, 4294901760
      %1333 = vmatpush1.xpose.msra.mxu0 %v1332
      %1334 = vmatprep.subr.mxu0 0.0
      %v1335 = vand.u32 %v395, 4294901760
      %1336 = vmatpush1.xpose.msra.mxu0 %v1335
      %1337 = vmatprep.subr.mxu0 0.0
      %v1338 = vand.u32 %v392, 4294901760
      %1339 = vmatpush1.xpose.msra.mxu0 %v1338
      %1340 = vmatprep.subr.mxu0 0.0
      %v1341 = vand.u32 %v389, 4294901760
      %1342 = vmatpush1.xpose.msra.mxu0 %v1341
      %1343 = vmatprep.subr.mxu0 0.0
      %v1344 = vand.u32 %v386, 4294901760
      %1345 = vmatpush1.xpose.msra.mxu0 %v1344
      %1346 = vmatprep.subr.mxu0 0.0
      %v1347 = vand.u32 %v383, 4294901760
      %1348 = vmatpush1.xpose.msra.mxu0 %v1347
      %1349 = vmatprep.subr.mxu0 0.0
      %v1350 = vand.u32 %v380, 4294901760
      %1351 = vmatpush1.xpose.msra.mxu0 %v1350
      %1352 = vmatprep.subr.mxu0 0.0
      %v1353 = vand.u32 %v377, 4294901760
      %1354 = vmatpush1.xpose.msra.mxu0 %v1353
      %1355 = vmatprep.subr.mxu0 0.0
      %v1356 = vand.u32 %v374, 4294901760
      %1357 = vmatpush1.xpose.msra.mxu0 %v1356
      %1358 = vmatprep.subr.mxu0 0.0
      %v1359 = vand.u32 %v371, 4294901760
      %1360 = vmatpush1.xpose.msra.mxu0 %v1359
      %1361 = vmatprep.subr.mxu0 0.0
      %v1362 = vand.u32 %v368, 4294901760
      %1363 = vmatpush1.xpose.msra.mxu0 %v1362
      %1364 = vmatprep.subr.mxu0 0.0
      %v1365 = vand.u32 %v365, 4294901760
      %1366 = vmatpush1.xpose.msra.mxu0 %v1365
      %1367 = vmatprep.subr.mxu0 0.0
      %v1368 = vand.u32 %v362, 4294901760
      %1369 = vmatpush1.xpose.msra.mxu0 %v1368
      %1370 = vmatprep.subr.mxu0 0.0
      %v1371 = vand.u32 %v359, 4294901760
      %1372 = vmatpush1.xpose.msra.mxu0 %v1371
      %1373 = vmatprep.subr.mxu0 0.0
      %v1374 = vand.u32 %v356, 4294901760
      %1375 = vmatpush1.xpose.msra.mxu0 %v1374
      %1376 = vmatprep.subr.mxu0 0.0
      %v1377 = vand.u32 %v449, 4294901760
      %1378 = vmatpush2.xpose.msra.mxu0 %v1377
      %1379 = vmatprep.subr.mxu0 0.0
      %v1380 = vand.u32 %v446, 4294901760
      %1381 = vmatpush2.xpose.msra.mxu0 %v1380
      %1382 = vmatprep.subr.mxu0 0.0
      %v1383 = vand.u32 %v443, 4294901760
      %1384 = vmatpush2.xpose.msra.mxu0 %v1383
      %1385 = vmatprep.subr.mxu0 0.0
      %v1386 = vand.u32 %v440, 4294901760
      %1387 = vmatpush2.xpose.msra.mxu0 %v1386
      %1388 = vmatprep.subr.mxu0 0.0
      %v1389 = vand.u32 %v437, 4294901760
      %1390 = vmatpush2.xpose.msra.mxu0 %v1389
      %1391 = vmatprep.subr.mxu0 0.0
      %v1392 = vand.u32 %v434, 4294901760
      %1393 = vmatpush2.xpose.msra.mxu0 %v1392
      %1394 = vmatprep.subr.mxu0 0.0
      %v1395 = vand.u32 %v431, 4294901760
      %1396 = vmatpush2.xpose.msra.mxu0 %v1395
      %1397 = vmatprep.subr.mxu0 0.0
      %v1398 = vand.u32 %v428, 4294901760
      %1399 = vmatpush2.xpose.msra.mxu0 %v1398
      %1400 = vmatprep.subr.mxu0 0.0
      %v1401 = vand.u32 %v425, 4294901760
      %1402 = vmatpush2.xpose.msra.mxu0 %v1401
      %1403 = vmatprep.subr.mxu0 0.0
      %v1404 = vand.u32 %v422, 4294901760
      %1405 = vmatpush2.xpose.msra.mxu0 %v1404
      %1406 = vmatprep.subr.mxu0 0.0
      %v1407 = vand.u32 %v419, 4294901760
      %1408 = vmatpush2.xpose.msra.mxu0 %v1407
      %1409 = vmatprep.subr.mxu0 0.0
      %v1410 = vand.u32 %v416, 4294901760
      %1411 = vmatpush2.xpose.msra.mxu0 %v1410
      %1412 = vmatprep.subr.mxu0 0.0
      %v1413 = vand.u32 %v413, 4294901760
      %1414 = vmatpush2.xpose.msra.mxu0 %v1413
      %1415 = vmatprep.subr.mxu0 0.0
      %v1416 = vand.u32 %v410, 4294901760
      %1417 = vmatpush2.xpose.msra.mxu0 %v1416
      %1418 = vmatprep.subr.mxu0 0.0
      %v1419 = vand.u32 %v407, 4294901760
      %1420 = vmatpush2.xpose.msra.mxu0 %v1419
      %1421 = vmatprep.subr.mxu0 0.0
      %v1422 = vand.u32 %v404, 4294901760
      %1423 = vmatpush2.xpose.msra.mxu0 %v1422
      %1424 = vmatprep.mubr.f32.mxu0 0.0
      %v1425 = vand.u32 %v344, 4294901760
      %1426 = vmatmul.mubr.f32.gmra.mxu0 %v1425
      %v1427 = vpop.f32.mrf.mxu0
      %v1428 = vadd.f32 %v1303, %v1427
      %v1429 = vpop.f32.mrf.mxu0
      %v1430 = vadd.f32 %v1305, %v1429
      %1431 = vmatprep.mubr.f32.mxu0 0.0
      %v1432 = vand.u32 %v347, 4294901760
      %1433 = vmatmul.mubr.f32.gmra.mxu0 %v1432
      %v1434 = vpop.f32.mrf.mxu0
      %v1435 = vadd.f32 %v1310, %v1434
      %v1436 = vpop.f32.mrf.mxu0
      %v1437 = vadd.f32 %v1312, %v1436
      %1438 = vmatprep.mubr.f32.mxu0 0.0
      %v1439 = vand.u32 %v350, 4294901760
      %1440 = vmatmul.mubr.f32.gmra.mxu0 %v1439
      %v1441 = vpop.f32.mrf.mxu0
      %v1442 = vadd.f32 %v1317, %v1441
      %v1443 = vpop.f32.mrf.mxu0
      %v1444 = vadd.f32 %v1319, %v1443
      %1445 = vmatprep.mubr.f32.mxu0 0.0
      %v1446 = vand.u32 %v353, 4294901760
      %1447 = vmatmul.mubr.f32.gmra.mxu0 %v1446
      %v1448 = vpop.f32.mrf.mxu0
      %v1449 = vadd.f32 %v1324, %v1448
      %v1450 = vpop.f32.mrf.mxu0
      %v1451 = vadd.f32 %v1326, %v1450
      %1452 = vdwg.mxu0
      %v1453 = vmax.f32 %v1428, 0.0
      %v1454 = vmax.f32 %v1430, 0.0
      %v1455 = vmax.f32 %v1435, 0.0
      %v1456 = vmax.f32 %v1437, 0.0
      %v1457 = vmax.f32 %v1442, 0.0
      %v1458 = vmax.f32 %v1444, 0.0
      %v1459 = vmax.f32 %v1449, 0.0
      %v1460 = vmax.f32 %v1451, 0.0
      %v1461 = vld [vmem:[%s3] sm:$0xff]
      %v1462 = vld [vmem:[%s3 + $0x8] sm:$0xff]
      %v1463 = vld [vmem:[%s3 + $0x10] sm:$0xff]
      %v1464 = vld [vmem:[%s3 + $0x18] sm:$0xff]
      %v1465 = vld [vmem:[%s4] sm:$0xff]
      %v1466 = vld [vmem:[%s4 + $0x8] sm:$0xff]
      %v1467 = vld [vmem:[%s4 + $0x10] sm:$0xff]
      %v1468 = vld [vmem:[%s4 + $0x18] sm:$0xff]
      %1470 = vset.pattern.permute.xlu0 0
      %1471 = vperm.xlu0 %1470, %v1465
      %v1472 = vpop.permute.xlu0 %1471
      %1475 = vset.pattern.permute.xlu0 0
      %1476 = vperm.xlu0 %1475, %v1466
      %v1477 = vpop.permute.xlu0 %1476
      %1480 = vset.pattern.permute.xlu0 0
      %1481 = vperm.xlu0 %1480, %v1467
      %v1482 = vpop.permute.xlu0 %1481
      %1485 = vset.pattern.permute.xlu0 0
      %1486 = vperm.xlu0 %1485, %v1468
      %v1487 = vpop.permute.xlu0 %1486
      %vm1489 = vcmask 261120
      %v1491 = vsel %vm1489, %v1461, 0
      %v1494 = vsel %vm1489, %v1462, 0
      %v1497 = vsel %vm1489, %v1463, 0
      %v1500 = vsel %vm1489, %v1464, 0
      %1502 = vmatprep.subr.mxu0 0.0
      %1503 = vmatpush1.msra.mxu0 0.0
      %1504 = vmatprep.subr.mxu0 0.0
      %1505 = vmatpush1.msra.mxu0 0.0
      %1506 = vmatprep.subr.mxu0 0.0
      %1507 = vmatpush1.msra.mxu0 0.0
      %1508 = vmatprep.subr.mxu0 0.0
      %1509 = vmatpush1.msra.mxu0 0.0
      %1510 = vmatprep.subr.mxu0 0.0
      %1511 = vmatpush1.msra.mxu0 0.0
      %1512 = vmatprep.subr.mxu0 0.0
      %1513 = vmatpush1.msra.mxu0 0.0
      %1514 = vmatprep.subr.mxu0 0.0
      %1515 = vmatpush1.msra.mxu0 0.0
      %1516 = vmatprep.subr.mxu0 0.0
      %1517 = vmatpush1.msra.mxu0 0.0
      %1518 = vmatprep.subr.mxu0 0.0
      %1519 = vmatpush1.msra.mxu0 0.0
      %1520 = vmatprep.subr.mxu0 0.0
      %1521 = vmatpush1.msra.mxu0 0.0
      %1522 = vmatprep.subr.mxu0 0.0
      %1523 = vmatpush1.msra.mxu0 0.0
      %1524 = vmatprep.subr.mxu0 0.0
      %1525 = vmatpush1.msra.mxu0 0.0
      %v1526 = vand.u32 %v1460, 4294901760
      %1527 = vmatprep.subr.mxu0 %v1526
      %v1528 = vand.u32 %v1459, 4294901760
      %1529 = vmatpush1.msra.mxu0 %v1528
      %v1530 = vand.u32 %v1458, 4294901760
      %1531 = vmatprep.subr.mxu0 %v1530
      %v1532 = vand.u32 %v1457, 4294901760
      %1533 = vmatpush1.msra.mxu0 %v1532
      %v1534 = vand.u32 %v1456, 4294901760
      %1535 = vmatprep.subr.mxu0 %v1534
      %v1536 = vand.u32 %v1455, 4294901760
      %1537 = vmatpush1.msra.mxu0 %v1536
      %v1538 = vand.u32 %v1454, 4294901760
      %1539 = vmatprep.subr.mxu0 %v1538
      %v1540 = vand.u32 %v1453, 4294901760
      %1541 = vmatpush1.msra.mxu0 %v1540
      %1542 = vmatprep.subr.mxu0 0.0
      %1543 = vmatpush2.msra.mxu0 0.0
      %1544 = vmatprep.subr.mxu0 0.0
      %1545 = vmatpush2.msra.mxu0 0.0
      %1546 = vmatprep.subr.mxu0 0.0
      %1547 = vmatpush2.msra.mxu0 0.0
      %1548 = vmatprep.subr.mxu0 0.0
      %1549 = vmatpush2.msra.mxu0 0.0
      %1550 = vmatprep.subr.mxu0 0.0
      %1551 = vmatpush2.msra.mxu0 0.0
      %1552 = vmatprep.subr.mxu0 0.0
      %1553 = vmatpush2.msra.mxu0 0.0
      %1554 = vmatprep.subr.mxu0 0.0
      %1555 = vmatpush2.msra.mxu0 0.0
      %1556 = vmatprep.subr.mxu0 0.0
      %1557 = vmatpush2.msra.mxu0 0.0
      %1558 = vmatprep.subr.mxu0 0.0
      %1559 = vmatpush2.msra.mxu0 0.0
      %1560 = vmatprep.subr.mxu0 0.0
      %1561 = vmatpush2.msra.mxu0 0.0
      %1562 = vmatprep.subr.mxu0 0.0
      %1563 = vmatpush2.msra.mxu0 0.0
      %1564 = vmatprep.subr.mxu0 0.0
      %1565 = vmatpush2.msra.mxu0 0.0
      %1566 = vmatprep.subr.mxu0 0.0
      %1567 = vmatpush2.msra.mxu0 0.0
      %1568 = vmatprep.subr.mxu0 0.0
      %1569 = vmatpush2.msra.mxu0 0.0
      %1570 = vmatprep.subr.mxu0 0.0
      %1571 = vmatpush2.msra.mxu0 0.0
      %1572 = vmatprep.subr.mxu0 0.0
      %1573 = vmatpush2.msra.mxu0 0.0
      %1574 = vmatprep.mubr.f32.mxu0 0.0
      %v1575 = vand.u32 %v1491, 4294901760
      %v1576 = vsub.f32 %v1491, %v1575
      %v1577 = vand.u32 %v1576, 4294901760
      %v1578 = vsub.f32 %v1576, %v1577
      %v1579 = vand.u32 %v1578, 4294901760
      %1580 = vmatmul.mubr.f32.gmra.mxu0 %v1579
      %v1581 = vpop.f32.mrf.mxu0
      %v1582 = vadd.f32 %v1472, %v1581
      %v1583 = vpop.f32.mrf.mxu0
      %v1584 = vadd.f32 %v1472, %v1583
      %1585 = vmatprep.mubr.f32.mxu0 0.0
      %v1586 = vand.u32 %v1494, 4294901760
      %v1587 = vsub.f32 %v1494, %v1586
      %v1588 = vand.u32 %v1587, 4294901760
      %v1589 = vsub.f32 %v1587, %v1588
      %v1590 = vand.u32 %v1589, 4294901760
      %1591 = vmatmul.mubr.f32.gmra.mxu0 %v1590
      %v1592 = vpop.f32.mrf.mxu0
      %v1593 = vadd.f32 %v1477, %v1592
      %v1594 = vpop.f32.mrf.mxu0
      %v1595 = vadd.f32 %v1477, %v1594
      %1596 = vmatprep.mubr.f32.mxu0 0.0
      %v1597 = vand.u32 %v1497, 4294901760
      %v1598 = vsub.f32 %v1497, %v1597
      %v1599 = vand.u32 %v1598, 4294901760
      %v1600 = vsub.f32 %v1598, %v1599
      %v1601 = vand.u32 %v1600, 4294901760
      %1602 = vmatmul.mubr.f32.gmra.mxu0 %v1601
      %v1603 = vpop.f32.mrf.mxu0
      %v1604 = vadd.f32 %v1482, %v1603
      %v1605 = vpop.f32.mrf.mxu0
      %v1606 = vadd.f32 %v1482, %v1605
      %1607 = vmatprep.mubr.f32.mxu0 0.0
      %v1608 = vand.u32 %v1500, 4294901760
      %v1609 = vsub.f32 %v1500, %v1608
      %v1610 = vand.u32 %v1609, 4294901760
      %v1611 = vsub.f32 %v1609, %v1610
      %v1612 = vand.u32 %v1611, 4294901760
      %1613 = vmatmul.mubr.f32.gmra.mxu0 %v1612
      %v1614 = vpop.f32.mrf.mxu0
      %v1615 = vadd.f32 %v1487, %v1614
      %v1616 = vpop.f32.mrf.mxu0
      %v1617 = vadd.f32 %v1487, %v1616
      %1618 = vdwg.mxu0
      %1619 = vmatprep.subr.mxu0 0.0
      %1620 = vmatpush1.msra.mxu0 0.0
      %1621 = vmatprep.subr.mxu0 0.0
      %1622 = vmatpush1.msra.mxu0 0.0
      %1623 = vmatprep.subr.mxu0 0.0
      %1624 = vmatpush1.msra.mxu0 0.0
      %1625 = vmatprep.subr.mxu0 0.0
      %1626 = vmatpush1.msra.mxu0 0.0
      %1627 = vmatprep.subr.mxu0 0.0
      %1628 = vmatpush1.msra.mxu0 0.0
      %1629 = vmatprep.subr.mxu0 0.0
      %1630 = vmatpush1.msra.mxu0 0.0
      %1631 = vmatprep.subr.mxu0 0.0
      %1632 = vmatpush1.msra.mxu0 0.0
      %1633 = vmatprep.subr.mxu0 0.0
      %1634 = vmatpush1.msra.mxu0 0.0
      %1635 = vmatprep.subr.mxu0 0.0
      %1636 = vmatpush1.msra.mxu0 0.0
      %1637 = vmatprep.subr.mxu0 0.0
      %1638 = vmatpush1.msra.mxu0 0.0
      %1639 = vmatprep.subr.mxu0 0.0
      %1640 = vmatpush1.msra.mxu0 0.0
      %1641 = vmatprep.subr.mxu0 0.0
      %1642 = vmatpush1.msra.mxu0 0.0
      %v1643 = vand.u32 %v1460, 4294901760
      %v1644 = vsub.f32 %v1460, %v1643
      %v1645 = vand.u32 %v1644, 4294901760
      %v1646 = vsub.f32 %v1644, %v1645
      %v1647 = vand.u32 %v1646, 4294901760
      %1648 = vmatprep.subr.mxu0 %v1647
      %v1649 = vand.u32 %v1459, 4294901760
      %v1650 = vsub.f32 %v1459, %v1649
      %v1651 = vand.u32 %v1650, 4294901760
      %v1652 = vsub.f32 %v1650, %v1651
      %v1653 = vand.u32 %v1652, 4294901760
      %1654 = vmatpush1.msra.mxu0 %v1653
      %v1655 = vand.u32 %v1458, 4294901760
      %v1656 = vsub.f32 %v1458, %v1655
      %v1657 = vand.u32 %v1656, 4294901760
      %v1658 = vsub.f32 %v1656, %v1657
      %v1659 = vand.u32 %v1658, 4294901760
      %1660 = vmatprep.subr.mxu0 %v1659
      %v1661 = vand.u32 %v1457, 4294901760
      %v1662 = vsub.f32 %v1457, %v1661
      %v1663 = vand.u32 %v1662, 4294901760
      %v1664 = vsub.f32 %v1662, %v1663
      %v1665 = vand.u32 %v1664, 4294901760
      %1666 = vmatpush1.msra.mxu0 %v1665
      %v1667 = vand.u32 %v1456, 4294901760
      %v1668 = vsub.f32 %v1456, %v1667
      %v1669 = vand.u32 %v1668, 4294901760
      %v1670 = vsub.f32 %v1668, %v1669
      %v1671 = vand.u32 %v1670, 4294901760
      %1672 = vmatprep.subr.mxu0 %v1671
      %v1673 = vand.u32 %v1455, 4294901760
      %v1674 = vsub.f32 %v1455, %v1673
      %v1675 = vand.u32 %v1674, 4294901760
      %v1676 = vsub.f32 %v1674, %v1675
      %v1677 = vand.u32 %v1676, 4294901760
      %1678 = vmatpush1.msra.mxu0 %v1677
      %v1679 = vand.u32 %v1454, 4294901760
      %v1680 = vsub.f32 %v1454, %v1679
      %v1681 = vand.u32 %v1680, 4294901760
      %v1682 = vsub.f32 %v1680, %v1681
      %v1683 = vand.u32 %v1682, 4294901760
      %1684 = vmatprep.subr.mxu0 %v1683
      %v1685 = vand.u32 %v1453, 4294901760
      %v1686 = vsub.f32 %v1453, %v1685
      %v1687 = vand.u32 %v1686, 4294901760
      %v1688 = vsub.f32 %v1686, %v1687
      %v1689 = vand.u32 %v1688, 4294901760
      %1690 = vmatpush1.msra.mxu0 %v1689
      %1691 = vmatprep.subr.mxu0 0.0
      %1692 = vmatpush2.msra.mxu0 0.0
      %1693 = vmatprep.subr.mxu0 0.0
      %1694 = vmatpush2.msra.mxu0 0.0
      %1695 = vmatprep.subr.mxu0 0.0
      %1696 = vmatpush2.msra.mxu0 0.0
      %1697 = vmatprep.subr.mxu0 0.0
      %1698 = vmatpush2.msra.mxu0 0.0
      %1699 = vmatprep.subr.mxu0 0.0
      %1700 = vmatpush2.msra.mxu0 0.0
      %1701 = vmatprep.subr.mxu0 0.0
      %1702 = vmatpush2.msra.mxu0 0.0
      %1703 = vmatprep.subr.mxu0 0.0
      %1704 = vmatpush2.msra.mxu0 0.0
      %1705 = vmatprep.subr.mxu0 0.0
      %1706 = vmatpush2.msra.mxu0 0.0
      %1707 = vmatprep.subr.mxu0 0.0
      %1708 = vmatpush2.msra.mxu0 0.0
      %1709 = vmatprep.subr.mxu0 0.0
      %1710 = vmatpush2.msra.mxu0 0.0
      %1711 = vmatprep.subr.mxu0 0.0
      %1712 = vmatpush2.msra.mxu0 0.0
      %1713 = vmatprep.subr.mxu0 0.0
      %1714 = vmatpush2.msra.mxu0 0.0
      %1715 = vmatprep.subr.mxu0 0.0
      %1716 = vmatpush2.msra.mxu0 0.0
      %1717 = vmatprep.subr.mxu0 0.0
      %1718 = vmatpush2.msra.mxu0 0.0
      %1719 = vmatprep.subr.mxu0 0.0
      %1720 = vmatpush2.msra.mxu0 0.0
      %1721 = vmatprep.subr.mxu0 0.0
      %1722 = vmatpush2.msra.mxu0 0.0
      %1723 = vmatprep.mubr.f32.mxu0 0.0
      %v1724 = vand.u32 %v1491, 4294901760
      %1725 = vmatmul.mubr.f32.gmra.mxu0 %v1724
      %v1726 = vpop.f32.mrf.mxu0
      %v1727 = vadd.f32 %v1582, %v1726
      %v1728 = vpop.f32.mrf.mxu0
      %v1729 = vadd.f32 %v1584, %v1728
      %1730 = vmatprep.mubr.f32.mxu0 0.0
      %v1731 = vand.u32 %v1494, 4294901760
      %1732 = vmatmul.mubr.f32.gmra.mxu0 %v1731
      %v1733 = vpop.f32.mrf.mxu0
      %v1734 = vadd.f32 %v1593, %v1733
      %v1735 = vpop.f32.mrf.mxu0
      %v1736 = vadd.f32 %v1595, %v1735
      %1737 = vmatprep.mubr.f32.mxu0 0.0
      %v1738 = vand.u32 %v1497, 4294901760
      %1739 = vmatmul.mubr.f32.gmra.mxu0 %v1738
      %v1740 = vpop.f32.mrf.mxu0
      %v1741 = vadd.f32 %v1604, %v1740
      %v1742 = vpop.f32.mrf.mxu0
      %v1743 = vadd.f32 %v1606, %v1742
      %1744 = vmatprep.mubr.f32.mxu0 0.0
      %v1745 = vand.u32 %v1500, 4294901760
      %1746 = vmatmul.mubr.f32.gmra.mxu0 %v1745
      %v1747 = vpop.f32.mrf.mxu0
      %v1748 = vadd.f32 %v1615, %v1747
      %v1749 = vpop.f32.mrf.mxu0
      %v1750 = vadd.f32 %v1617, %v1749
      %1751 = vdwg.mxu0
      %1752 = vmatprep.subr.mxu0 0.0
      %1753 = vmatpush1.msra.mxu0 0.0
      %1754 = vmatprep.subr.mxu0 0.0
      %1755 = vmatpush1.msra.mxu0 0.0
      %1756 = vmatprep.subr.mxu0 0.0
      %1757 = vmatpush1.msra.mxu0 0.0
      %1758 = vmatprep.subr.mxu0 0.0
      %1759 = vmatpush1.msra.mxu0 0.0
      %1760 = vmatprep.subr.mxu0 0.0
      %1761 = vmatpush1.msra.mxu0 0.0
      %1762 = vmatprep.subr.mxu0 0.0
      %1763 = vmatpush1.msra.mxu0 0.0
      %1764 = vmatprep.subr.mxu0 0.0
      %1765 = vmatpush1.msra.mxu0 0.0
      %1766 = vmatprep.subr.mxu0 0.0
      %1767 = vmatpush1.msra.mxu0 0.0
      %1768 = vmatprep.subr.mxu0 0.0
      %1769 = vmatpush1.msra.mxu0 0.0
      %1770 = vmatprep.subr.mxu0 0.0
      %1771 = vmatpush1.msra.mxu0 0.0
      %1772 = vmatprep.subr.mxu0 0.0
      %1773 = vmatpush1.msra.mxu0 0.0
      %1774 = vmatprep.subr.mxu0 0.0
      %1775 = vmatpush1.msra.mxu0 0.0
      %v1776 = vand.u32 %v1460, 4294901760
      %v1777 = vsub.f32 %v1460, %v1776
      %1778 = vmatprep.subr.mxu0 %v1777
      %v1779 = vand.u32 %v1459, 4294901760
      %v1780 = vsub.f32 %v1459, %v1779
      %1781 = vmatpush1.msra.mxu0 %v1780
      %v1782 = vand.u32 %v1458, 4294901760
      %v1783 = vsub.f32 %v1458, %v1782
      %1784 = vmatprep.subr.mxu0 %v1783
      %v1785 = vand.u32 %v1457, 4294901760
      %v1786 = vsub.f32 %v1457, %v1785
      %1787 = vmatpush1.msra.mxu0 %v1786
      %v1788 = vand.u32 %v1456, 4294901760
      %v1789 = vsub.f32 %v1456, %v1788
      %1790 = vmatprep.subr.mxu0 %v1789
      %v1791 = vand.u32 %v1455, 4294901760
      %v1792 = vsub.f32 %v1455, %v1791
      %1793 = vmatpush1.msra.mxu0 %v1792
      %v1794 = vand.u32 %v1454, 4294901760
      %v1795 = vsub.f32 %v1454, %v1794
      %1796 = vmatprep.subr.mxu0 %v1795
      %v1797 = vand.u32 %v1453, 4294901760
      %v1798 = vsub.f32 %v1453, %v1797
      %1799 = vmatpush1.msra.mxu0 %v1798
      %1800 = vmatprep.subr.mxu0 0.0
      %1801 = vmatpush2.msra.mxu0 0.0
      %1802 = vmatprep.subr.mxu0 0.0
      %1803 = vmatpush2.msra.mxu0 0.0
      %1804 = vmatprep.subr.mxu0 0.0
      %1805 = vmatpush2.msra.mxu0 0.0
      %1806 = vmatprep.subr.mxu0 0.0
      %1807 = vmatpush2.msra.mxu0 0.0
      %1808 = vmatprep.subr.mxu0 0.0
      %1809 = vmatpush2.msra.mxu0 0.0
      %1810 = vmatprep.subr.mxu0 0.0
      %1811 = vmatpush2.msra.mxu0 0.0
      %1812 = vmatprep.subr.mxu0 0.0
      %1813 = vmatpush2.msra.mxu0 0.0
      %1814 = vmatprep.subr.mxu0 0.0
      %1815 = vmatpush2.msra.mxu0 0.0
      %1816 = vmatprep.subr.mxu0 0.0
      %1817 = vmatpush2.msra.mxu0 0.0
      %1818 = vmatprep.subr.mxu0 0.0
      %1819 = vmatpush2.msra.mxu0 0.0
      %1820 = vmatprep.subr.mxu0 0.0
      %1821 = vmatpush2.msra.mxu0 0.0
      %1822 = vmatprep.subr.mxu0 0.0
      %1823 = vmatpush2.msra.mxu0 0.0
      %1824 = vmatprep.subr.mxu0 0.0
      %1825 = vmatpush2.msra.mxu0 0.0
      %1826 = vmatprep.subr.mxu0 0.0
      %1827 = vmatpush2.msra.mxu0 0.0
      %1828 = vmatprep.subr.mxu0 0.0
      %1829 = vmatpush2.msra.mxu0 0.0
      %1830 = vmatprep.subr.mxu0 0.0
      %1831 = vmatpush2.msra.mxu0 0.0
      %1832 = vmatprep.mubr.f32.mxu0 0.0
      %v1833 = vand.u32 %v1491, 4294901760
      %v1834 = vsub.f32 %v1491, %v1833
      %1835 = vmatmul.mubr.f32.gmra.mxu0 %v1834
      %v1836 = vpop.f32.mrf.mxu0
      %v1837 = vadd.f32 %v1727, %v1836
      %v1838 = vpop.f32.mrf.mxu0
      %v1839 = vadd.f32 %v1729, %v1838
      %1840 = vmatprep.mubr.f32.mxu0 0.0
      %v1841 = vand.u32 %v1494, 4294901760
      %v1842 = vsub.f32 %v1494, %v1841
      %1843 = vmatmul.mubr.f32.gmra.mxu0 %v1842
      %v1844 = vpop.f32.mrf.mxu0
      %v1845 = vadd.f32 %v1734, %v1844
      %v1846 = vpop.f32.mrf.mxu0
      %v1847 = vadd.f32 %v1736, %v1846
      %1848 = vmatprep.mubr.f32.mxu0 0.0
      %v1849 = vand.u32 %v1497, 4294901760
      %v1850 = vsub.f32 %v1497, %v1849
      %1851 = vmatmul.mubr.f32.gmra.mxu0 %v1850
      %v1852 = vpop.f32.mrf.mxu0
      %v1853 = vadd.f32 %v1741, %v1852
      %v1854 = vpop.f32.mrf.mxu0
      %v1855 = vadd.f32 %v1743, %v1854
      %1856 = vmatprep.mubr.f32.mxu0 0.0
      %v1857 = vand.u32 %v1500, 4294901760
      %v1858 = vsub.f32 %v1500, %v1857
      %1859 = vmatmul.mubr.f32.gmra.mxu0 %v1858
      %v1860 = vpop.f32.mrf.mxu0
      %v1861 = vadd.f32 %v1748, %v1860
      %v1862 = vpop.f32.mrf.mxu0
      %v1863 = vadd.f32 %v1750, %v1862
      %1864 = vdwg.mxu0
      %1865 = vmatprep.subr.mxu0 0.0
      %1866 = vmatpush1.msra.mxu0 0.0
      %1867 = vmatprep.subr.mxu0 0.0
      %1868 = vmatpush1.msra.mxu0 0.0
      %1869 = vmatprep.subr.mxu0 0.0
      %1870 = vmatpush1.msra.mxu0 0.0
      %1871 = vmatprep.subr.mxu0 0.0
      %1872 = vmatpush1.msra.mxu0 0.0
      %1873 = vmatprep.subr.mxu0 0.0
      %1874 = vmatpush1.msra.mxu0 0.0
      %1875 = vmatprep.subr.mxu0 0.0
      %1876 = vmatpush1.msra.mxu0 0.0
      %1877 = vmatprep.subr.mxu0 0.0
      %1878 = vmatpush1.msra.mxu0 0.0
      %1879 = vmatprep.subr.mxu0 0.0
      %1880 = vmatpush1.msra.mxu0 0.0
      %1881 = vmatprep.subr.mxu0 0.0
      %1882 = vmatpush1.msra.mxu0 0.0
      %1883 = vmatprep.subr.mxu0 0.0
      %1884 = vmatpush1.msra.mxu0 0.0
      %1885 = vmatprep.subr.mxu0 0.0
      %1886 = vmatpush1.msra.mxu0 0.0
      %1887 = vmatprep.subr.mxu0 0.0
      %1888 = vmatpush1.msra.mxu0 0.0
      %v1889 = vand.u32 %v1460, 4294901760
      %1890 = vmatprep.subr.mxu0 %v1889
      %v1891 = vand.u32 %v1459, 4294901760
      %1892 = vmatpush1.msra.mxu0 %v1891
      %v1893 = vand.u32 %v1458, 4294901760
      %1894 = vmatprep.subr.mxu0 %v1893
      %v1895 = vand.u32 %v1457, 4294901760
      %1896 = vmatpush1.msra.mxu0 %v1895
      %v1897 = vand.u32 %v1456, 4294901760
      %1898 = vmatprep.subr.mxu0 %v1897
      %v1899 = vand.u32 %v1455, 4294901760
      %1900 = vmatpush1.msra.mxu0 %v1899
      %v1901 = vand.u32 %v1454, 4294901760
      %1902 = vmatprep.subr.mxu0 %v1901
      %v1903 = vand.u32 %v1453, 4294901760
      %1904 = vmatpush1.msra.mxu0 %v1903
      %1905 = vmatprep.subr.mxu0 0.0
      %1906 = vmatpush2.msra.mxu0 0.0
      %1907 = vmatprep.subr.mxu0 0.0
      %1908 = vmatpush2.msra.mxu0 0.0
      %1909 = vmatprep.subr.mxu0 0.0
      %1910 = vmatpush2.msra.mxu0 0.0
      %1911 = vmatprep.subr.mxu0 0.0
      %1912 = vmatpush2.msra.mxu0 0.0
      %1913 = vmatprep.subr.mxu0 0.0
      %1914 = vmatpush2.msra.mxu0 0.0
      %1915 = vmatprep.subr.mxu0 0.0
      %1916 = vmatpush2.msra.mxu0 0.0
      %1917 = vmatprep.subr.mxu0 0.0
      %1918 = vmatpush2.msra.mxu0 0.0
      %1919 = vmatprep.subr.mxu0 0.0
      %1920 = vmatpush2.msra.mxu0 0.0
      %1921 = vmatprep.subr.mxu0 0.0
      %1922 = vmatpush2.msra.mxu0 0.0
      %1923 = vmatprep.subr.mxu0 0.0
      %1924 = vmatpush2.msra.mxu0 0.0
      %1925 = vmatprep.subr.mxu0 0.0
      %1926 = vmatpush2.msra.mxu0 0.0
      %1927 = vmatprep.subr.mxu0 0.0
      %1928 = vmatpush2.msra.mxu0 0.0
      %1929 = vmatprep.subr.mxu0 0.0
      %1930 = vmatpush2.msra.mxu0 0.0
      %1931 = vmatprep.subr.mxu0 0.0
      %1932 = vmatpush2.msra.mxu0 0.0
      %1933 = vmatprep.subr.mxu0 0.0
      %1934 = vmatpush2.msra.mxu0 0.0
      %1935 = vmatprep.subr.mxu0 0.0
      %1936 = vmatpush2.msra.mxu0 0.0
      %1937 = vmatprep.mubr.f32.mxu0 0.0
      %v1938 = vand.u32 %v1491, 4294901760
      %v1939 = vsub.f32 %v1491, %v1938
      %v1940 = vand.u32 %v1939, 4294901760
      %1941 = vmatmul.mubr.f32.gmra.mxu0 %v1940
      %v1942 = vpop.f32.mrf.mxu0
      %v1943 = vadd.f32 %v1837, %v1942
      %v1944 = vpop.f32.mrf.mxu0
      %v1945 = vadd.f32 %v1839, %v1944
      %1946 = vmatprep.mubr.f32.mxu0 0.0
      %v1947 = vand.u32 %v1494, 4294901760
      %v1948 = vsub.f32 %v1494, %v1947
      %v1949 = vand.u32 %v1948, 4294901760
      %1950 = vmatmul.mubr.f32.gmra.mxu0 %v1949
      %v1951 = vpop.f32.mrf.mxu0
      %v1952 = vadd.f32 %v1845, %v1951
      %v1953 = vpop.f32.mrf.mxu0
      %v1954 = vadd.f32 %v1847, %v1953
      %1955 = vmatprep.mubr.f32.mxu0 0.0
      %v1956 = vand.u32 %v1497, 4294901760
      %v1957 = vsub.f32 %v1497, %v1956
      %v1958 = vand.u32 %v1957, 4294901760
      %1959 = vmatmul.mubr.f32.gmra.mxu0 %v1958
      %v1960 = vpop.f32.mrf.mxu0
      %v1961 = vadd.f32 %v1853, %v1960
      %v1962 = vpop.f32.mrf.mxu0
      %v1963 = vadd.f32 %v1855, %v1962
      %1964 = vmatprep.mubr.f32.mxu0 0.0
      %v1965 = vand.u32 %v1500, 4294901760
      %v1966 = vsub.f32 %v1500, %v1965
      %v1967 = vand.u32 %v1966, 4294901760
      %1968 = vmatmul.mubr.f32.gmra.mxu0 %v1967
      %v1969 = vpop.f32.mrf.mxu0
      %v1970 = vadd.f32 %v1861, %v1969
      %v1971 = vpop.f32.mrf.mxu0
      %v1972 = vadd.f32 %v1863, %v1971
      %1973 = vdwg.mxu0
      %1974 = vmatprep.subr.mxu0 0.0
      %1975 = vmatpush1.msra.mxu0 0.0
      %1976 = vmatprep.subr.mxu0 0.0
      %1977 = vmatpush1.msra.mxu0 0.0
      %1978 = vmatprep.subr.mxu0 0.0
      %1979 = vmatpush1.msra.mxu0 0.0
      %1980 = vmatprep.subr.mxu0 0.0
      %1981 = vmatpush1.msra.mxu0 0.0
      %1982 = vmatprep.subr.mxu0 0.0
      %1983 = vmatpush1.msra.mxu0 0.0
      %1984 = vmatprep.subr.mxu0 0.0
      %1985 = vmatpush1.msra.mxu0 0.0
      %1986 = vmatprep.subr.mxu0 0.0
      %1987 = vmatpush1.msra.mxu0 0.0
      %1988 = vmatprep.subr.mxu0 0.0
      %1989 = vmatpush1.msra.mxu0 0.0
      %1990 = vmatprep.subr.mxu0 0.0
      %1991 = vmatpush1.msra.mxu0 0.0
      %1992 = vmatprep.subr.mxu0 0.0
      %1993 = vmatpush1.msra.mxu0 0.0
      %1994 = vmatprep.subr.mxu0 0.0
      %1995 = vmatpush1.msra.mxu0 0.0
      %1996 = vmatprep.subr.mxu0 0.0
      %1997 = vmatpush1.msra.mxu0 0.0
      %v1998 = vand.u32 %v1460, 4294901760
      %v1999 = vsub.f32 %v1460, %v1998
      %v2000 = vand.u32 %v1999, 4294901760
      %2001 = vmatprep.subr.mxu0 %v2000
      %v2002 = vand.u32 %v1459, 4294901760
      %v2003 = vsub.f32 %v1459, %v2002
      %v2004 = vand.u32 %v2003, 4294901760
      %2005 = vmatpush1.msra.mxu0 %v2004
      %v2006 = vand.u32 %v1458, 4294901760
      %v2007 = vsub.f32 %v1458, %v2006
      %v2008 = vand.u32 %v2007, 4294901760
      %2009 = vmatprep.subr.mxu0 %v2008
      %v2010 = vand.u32 %v1457, 4294901760
      %v2011 = vsub.f32 %v1457, %v2010
      %v2012 = vand.u32 %v2011, 4294901760
      %2013 = vmatpush1.msra.mxu0 %v2012
      %v2014 = vand.u32 %v1456, 4294901760
      %v2015 = vsub.f32 %v1456, %v2014
      %v2016 = vand.u32 %v2015, 4294901760
      %2017 = vmatprep.subr.mxu0 %v2016
      %v2018 = vand.u32 %v1455, 4294901760
      %v2019 = vsub.f32 %v1455, %v2018
      %v2020 = vand.u32 %v2019, 4294901760
      %2021 = vmatpush1.msra.mxu0 %v2020
      %v2022 = vand.u32 %v1454, 4294901760
      %v2023 = vsub.f32 %v1454, %v2022
      %v2024 = vand.u32 %v2023, 4294901760
      %2025 = vmatprep.subr.mxu0 %v2024
      %v2026 = vand.u32 %v1453, 4294901760
      %v2027 = vsub.f32 %v1453, %v2026
      %v2028 = vand.u32 %v2027, 4294901760
      %2029 = vmatpush1.msra.mxu0 %v2028
      %2030 = vmatprep.subr.mxu0 0.0
      %2031 = vmatpush2.msra.mxu0 0.0
      %2032 = vmatprep.subr.mxu0 0.0
      %2033 = vmatpush2.msra.mxu0 0.0
      %2034 = vmatprep.subr.mxu0 0.0
      %2035 = vmatpush2.msra.mxu0 0.0
      %2036 = vmatprep.subr.mxu0 0.0
      %2037 = vmatpush2.msra.mxu0 0.0
      %2038 = vmatprep.subr.mxu0 0.0
      %2039 = vmatpush2.msra.mxu0 0.0
      %2040 = vmatprep.subr.mxu0 0.0
      %2041 = vmatpush2.msra.mxu0 0.0
      %2042 = vmatprep.subr.mxu0 0.0
      %2043 = vmatpush2.msra.mxu0 0.0
      %2044 = vmatprep.subr.mxu0 0.0
      %2045 = vmatpush2.msra.mxu0 0.0
      %2046 = vmatprep.subr.mxu0 0.0
      %2047 = vmatpush2.msra.mxu0 0.0
      %2048 = vmatprep.subr.mxu0 0.0
      %2049 = vmatpush2.msra.mxu0 0.0
      %2050 = vmatprep.subr.mxu0 0.0
      %2051 = vmatpush2.msra.mxu0 0.0
      %2052 = vmatprep.subr.mxu0 0.0
      %2053 = vmatpush2.msra.mxu0 0.0
      %2054 = vmatprep.subr.mxu0 0.0
      %2055 = vmatpush2.msra.mxu0 0.0
      %2056 = vmatprep.subr.mxu0 0.0
      %2057 = vmatpush2.msra.mxu0 0.0
      %2058 = vmatprep.subr.mxu0 0.0
      %2059 = vmatpush2.msra.mxu0 0.0
      %2060 = vmatprep.subr.mxu0 0.0
      %2061 = vmatpush2.msra.mxu0 0.0
      %2062 = vmatprep.mubr.f32.mxu0 0.0
      %v2063 = vand.u32 %v1491, 4294901760
      %2064 = vmatmul.mubr.f32.gmra.mxu0 %v2063
      %v2065 = vpop.f32.mrf.mxu0
      %v2066 = vadd.f32 %v1943, %v2065
      %v2067 = vpop.f32.mrf.mxu0
      %v2068 = vadd.f32 %v1945, %v2067
      %2069 = vmatprep.mubr.f32.mxu0 0.0
      %v2070 = vand.u32 %v1494, 4294901760
      %2071 = vmatmul.mubr.f32.gmra.mxu0 %v2070
      %v2072 = vpop.f32.mrf.mxu0
      %v2073 = vadd.f32 %v1952, %v2072
      %v2074 = vpop.f32.mrf.mxu0
      %v2075 = vadd.f32 %v1954, %v2074
      %2076 = vmatprep.mubr.f32.mxu0 0.0
      %v2077 = vand.u32 %v1497, 4294901760
      %2078 = vmatmul.mubr.f32.gmra.mxu0 %v2077
      %v2079 = vpop.f32.mrf.mxu0
      %v2080 = vadd.f32 %v1961, %v2079
      %v2081 = vpop.f32.mrf.mxu0
      %v2082 = vadd.f32 %v1963, %v2081
      %2083 = vmatprep.mubr.f32.mxu0 0.0
      %v2084 = vand.u32 %v1500, 4294901760
      %2085 = vmatmul.mubr.f32.gmra.mxu0 %v2084
      %v2086 = vpop.f32.mrf.mxu0
      %v2087 = vadd.f32 %v1970, %v2086
      %v2088 = vpop.f32.mrf.mxu0
      %v2089 = vadd.f32 %v1972, %v2088
      %2090 = vdwg.mxu0
      %2091 = vmatprep.subr.mxu0 0.0
      %2092 = vmatpush1.msra.mxu0 0.0
      %2093 = vmatprep.subr.mxu0 0.0
      %2094 = vmatpush1.msra.mxu0 0.0
      %2095 = vmatprep.subr.mxu0 0.0
      %2096 = vmatpush1.msra.mxu0 0.0
      %2097 = vmatprep.subr.mxu0 0.0
      %2098 = vmatpush1.msra.mxu0 0.0
      %2099 = vmatprep.subr.mxu0 0.0
      %2100 = vmatpush1.msra.mxu0 0.0
      %2101 = vmatprep.subr.mxu0 0.0
      %2102 = vmatpush1.msra.mxu0 0.0
      %2103 = vmatprep.subr.mxu0 0.0
      %2104 = vmatpush1.msra.mxu0 0.0
      %2105 = vmatprep.subr.mxu0 0.0
      %2106 = vmatpush1.msra.mxu0 0.0
      %2107 = vmatprep.subr.mxu0 0.0
      %2108 = vmatpush1.msra.mxu0 0.0
      %2109 = vmatprep.subr.mxu0 0.0
      %2110 = vmatpush1.msra.mxu0 0.0
      %2111 = vmatprep.subr.mxu0 0.0
      %2112 = vmatpush1.msra.mxu0 0.0
      %2113 = vmatprep.subr.mxu0 0.0
      %2114 = vmatpush1.msra.mxu0 0.0
      %v2115 = vand.u32 %v1460, 4294901760
      %2116 = vmatprep.subr.mxu0 %v2115
      %v2117 = vand.u32 %v1459, 4294901760
      %2118 = vmatpush1.msra.mxu0 %v2117
      %v2119 = vand.u32 %v1458, 4294901760
      %2120 = vmatprep.subr.mxu0 %v2119
      %v2121 = vand.u32 %v1457, 4294901760
      %2122 = vmatpush1.msra.mxu0 %v2121
      %v2123 = vand.u32 %v1456, 4294901760
      %2124 = vmatprep.subr.mxu0 %v2123
      %v2125 = vand.u32 %v1455, 4294901760
      %2126 = vmatpush1.msra.mxu0 %v2125
      %v2127 = vand.u32 %v1454, 4294901760
      %2128 = vmatprep.subr.mxu0 %v2127
      %v2129 = vand.u32 %v1453, 4294901760
      %2130 = vmatpush1.msra.mxu0 %v2129
      %2131 = vmatprep.subr.mxu0 0.0
      %2132 = vmatpush2.msra.mxu0 0.0
      %2133 = vmatprep.subr.mxu0 0.0
      %2134 = vmatpush2.msra.mxu0 0.0
      %2135 = vmatprep.subr.mxu0 0.0
      %2136 = vmatpush2.msra.mxu0 0.0
      %2137 = vmatprep.subr.mxu0 0.0
      %2138 = vmatpush2.msra.mxu0 0.0
      %2139 = vmatprep.subr.mxu0 0.0
      %2140 = vmatpush2.msra.mxu0 0.0
      %2141 = vmatprep.subr.mxu0 0.0
      %2142 = vmatpush2.msra.mxu0 0.0
      %2143 = vmatprep.subr.mxu0 0.0
      %2144 = vmatpush2.msra.mxu0 0.0
      %2145 = vmatprep.subr.mxu0 0.0
      %2146 = vmatpush2.msra.mxu0 0.0
      %2147 = vmatprep.subr.mxu0 0.0
      %2148 = vmatpush2.msra.mxu0 0.0
      %2149 = vmatprep.subr.mxu0 0.0
      %2150 = vmatpush2.msra.mxu0 0.0
      %2151 = vmatprep.subr.mxu0 0.0
      %2152 = vmatpush2.msra.mxu0 0.0
      %2153 = vmatprep.subr.mxu0 0.0
      %2154 = vmatpush2.msra.mxu0 0.0
      %2155 = vmatprep.subr.mxu0 0.0
      %2156 = vmatpush2.msra.mxu0 0.0
      %2157 = vmatprep.subr.mxu0 0.0
      %2158 = vmatpush2.msra.mxu0 0.0
      %2159 = vmatprep.subr.mxu0 0.0
      %2160 = vmatpush2.msra.mxu0 0.0
      %2161 = vmatprep.subr.mxu0 0.0
      %2162 = vmatpush2.msra.mxu0 0.0
      %2163 = vmatprep.mubr.f32.mxu0 0.0
      %v2164 = vand.u32 %v1491, 4294901760
      %2165 = vmatmul.mubr.f32.gmra.mxu0 %v2164
      %v2166 = vpop.f32.mrf.mxu0
      %v2167 = vadd.f32 %v2066, %v2166
      %v2168 = vpop.f32.mrf.mxu0
      %v2169 = vadd.f32 %v2068, %v2168
      %2170 = vmatprep.mubr.f32.mxu0 0.0
      %v2171 = vand.u32 %v1494, 4294901760
      %2172 = vmatmul.mubr.f32.gmra.mxu0 %v2171
      %v2173 = vpop.f32.mrf.mxu0
      %v2174 = vadd.f32 %v2073, %v2173
      %v2175 = vpop.f32.mrf.mxu0
      %v2176 = vadd.f32 %v2075, %v2175
      %2177 = vmatprep.mubr.f32.mxu0 0.0
      %v2178 = vand.u32 %v1497, 4294901760
      %2179 = vmatmul.mubr.f32.gmra.mxu0 %v2178
      %v2180 = vpop.f32.mrf.mxu0
      %v2181 = vadd.f32 %v2080, %v2180
      %v2182 = vpop.f32.mrf.mxu0
      %v2183 = vadd.f32 %v2082, %v2182
      %2184 = vmatprep.mubr.f32.mxu0 0.0
      %v2185 = vand.u32 %v1500, 4294901760
      %2186 = vmatmul.mubr.f32.gmra.mxu0 %v2185
      %v2187 = vpop.f32.mrf.mxu0
      %v2188 = vadd.f32 %v2087, %v2187
      %v2189 = vpop.f32.mrf.mxu0
      %v2190 = vadd.f32 %v2089, %v2189
      %2191 = vdwg.mxu0
      %v2192 = vmax.f32 %v2167, 0.0
      %v2193 = vmax.f32 %v2169, 0.0
      %v2194 = vmax.f32 %v2174, 0.0
      %v2195 = vmax.f32 %v2176, 0.0
      %v2196 = vmax.f32 %v2181, 0.0
      %v2197 = vmax.f32 %v2183, 0.0
      %v2198 = vmax.f32 %v2188, 0.0
      %v2199 = vmax.f32 %v2190, 0.0
      %v2200 = vld [vmem:[%s5] sm:$0xff]
      %v2201 = vld [vmem:[%s6] sm:$0xff]
      %2203 = vset.pattern.permute.xlu0 0
      %2204 = vperm.xlu0 %2203, %v2201
      %v2205 = vpop.permute.xlu0 %2204
      %v2208 = vsel %vm1489, %v2200, 0
      %2210 = vmatprep.subr.mxu0 0.0
      %2211 = vmatpush1.msra.mxu0 0.0
      %2212 = vmatprep.subr.mxu0 0.0
      %2213 = vmatpush1.msra.mxu0 0.0
      %2214 = vmatprep.subr.mxu0 0.0
      %2215 = vmatpush1.msra.mxu0 0.0
      %2216 = vmatprep.subr.mxu0 0.0
      %2217 = vmatpush1.msra.mxu0 0.0
      %2218 = vmatprep.subr.mxu0 0.0
      %2219 = vmatpush1.msra.mxu0 0.0
      %2220 = vmatprep.subr.mxu0 0.0
      %2221 = vmatpush1.msra.mxu0 0.0
      %2222 = vmatprep.subr.mxu0 0.0
      %2223 = vmatpush1.msra.mxu0 0.0
      %2224 = vmatprep.subr.mxu0 0.0
      %2225 = vmatpush1.msra.mxu0 0.0
      %2226 = vmatprep.subr.mxu0 0.0
      %2227 = vmatpush1.msra.mxu0 0.0
      %2228 = vmatprep.subr.mxu0 0.0
      %2229 = vmatpush1.msra.mxu0 0.0
      %2230 = vmatprep.subr.mxu0 0.0
      %2231 = vmatpush1.msra.mxu0 0.0
      %2232 = vmatprep.subr.mxu0 0.0
      %2233 = vmatpush1.msra.mxu0 0.0
      %v2234 = vand.u32 %v2199, 4294901760
      %2235 = vmatprep.subr.mxu0 %v2234
      %v2236 = vand.u32 %v2198, 4294901760
      %2237 = vmatpush1.msra.mxu0 %v2236
      %v2238 = vand.u32 %v2197, 4294901760
      %2239 = vmatprep.subr.mxu0 %v2238
      %v2240 = vand.u32 %v2196, 4294901760
      %2241 = vmatpush1.msra.mxu0 %v2240
      %v2242 = vand.u32 %v2195, 4294901760
      %2243 = vmatprep.subr.mxu0 %v2242
      %v2244 = vand.u32 %v2194, 4294901760
      %2245 = vmatpush1.msra.mxu0 %v2244
      %v2246 = vand.u32 %v2193, 4294901760
      %2247 = vmatprep.subr.mxu0 %v2246
      %v2248 = vand.u32 %v2192, 4294901760
      %2249 = vmatpush1.msra.mxu0 %v2248
      %2250 = vmatprep.subr.mxu0 0.0
      %2251 = vmatpush2.msra.mxu0 0.0
      %2252 = vmatprep.subr.mxu0 0.0
      %2253 = vmatpush2.msra.mxu0 0.0
      %2254 = vmatprep.subr.mxu0 0.0
      %2255 = vmatpush2.msra.mxu0 0.0
      %2256 = vmatprep.subr.mxu0 0.0
      %2257 = vmatpush2.msra.mxu0 0.0
      %2258 = vmatprep.subr.mxu0 0.0
      %2259 = vmatpush2.msra.mxu0 0.0
      %2260 = vmatprep.subr.mxu0 0.0
      %2261 = vmatpush2.msra.mxu0 0.0
      %2262 = vmatprep.subr.mxu0 0.0
      %2263 = vmatpush2.msra.mxu0 0.0
      %2264 = vmatprep.subr.mxu0 0.0
      %2265 = vmatpush2.msra.mxu0 0.0
      %2266 = vmatprep.subr.mxu0 0.0
      %2267 = vmatpush2.msra.mxu0 0.0
      %2268 = vmatprep.subr.mxu0 0.0
      %2269 = vmatpush2.msra.mxu0 0.0
      %2270 = vmatprep.subr.mxu0 0.0
      %2271 = vmatpush2.msra.mxu0 0.0
      %2272 = vmatprep.subr.mxu0 0.0
      %2273 = vmatpush2.msra.mxu0 0.0
      %2274 = vmatprep.subr.mxu0 0.0
      %2275 = vmatpush2.msra.mxu0 0.0
      %2276 = vmatprep.subr.mxu0 0.0
      %2277 = vmatpush2.msra.mxu0 0.0
      %2278 = vmatprep.subr.mxu0 0.0
      %2279 = vmatpush2.msra.mxu0 0.0
      %2280 = vmatprep.subr.mxu0 0.0
      %2281 = vmatpush2.msra.mxu0 0.0
      %2282 = vmatprep.mubr.f32.mxu0 0.0
      %v2283 = vand.u32 %v2208, 4294901760
      %v2284 = vsub.f32 %v2208, %v2283
      %v2285 = vand.u32 %v2284, 4294901760
      %v2286 = vsub.f32 %v2284, %v2285
      %v2287 = vand.u32 %v2286, 4294901760
      %2288 = vmatmul.mubr.f32.gmra.mxu0 %v2287
      %v2289 = vpop.f32.mrf.mxu0
      %v2290 = vadd.f32 %v2205, %v2289
      %v2291 = vpop.f32.mrf.mxu0
      %v2292 = vadd.f32 %v2205, %v2291
      %2293 = vdwg.mxu0
      %2294 = vmatprep.subr.mxu0 0.0
      %2295 = vmatpush1.msra.mxu0 0.0
      %2296 = vmatprep.subr.mxu0 0.0
      %2297 = vmatpush1.msra.mxu0 0.0
      %2298 = vmatprep.subr.mxu0 0.0
      %2299 = vmatpush1.msra.mxu0 0.0
      %2300 = vmatprep.subr.mxu0 0.0
      %2301 = vmatpush1.msra.mxu0 0.0
      %2302 = vmatprep.subr.mxu0 0.0
      %2303 = vmatpush1.msra.mxu0 0.0
      %2304 = vmatprep.subr.mxu0 0.0
      %2305 = vmatpush1.msra.mxu0 0.0
      %2306 = vmatprep.subr.mxu0 0.0
      %2307 = vmatpush1.msra.mxu0 0.0
      %2308 = vmatprep.subr.mxu0 0.0
      %2309 = vmatpush1.msra.mxu0 0.0
      %2310 = vmatprep.subr.mxu0 0.0
      %2311 = vmatpush1.msra.mxu0 0.0
      %2312 = vmatprep.subr.mxu0 0.0
      %2313 = vmatpush1.msra.mxu0 0.0
      %2314 = vmatprep.subr.mxu0 0.0
      %2315 = vmatpush1.msra.mxu0 0.0
      %2316 = vmatprep.subr.mxu0 0.0
      %2317 = vmatpush1.msra.mxu0 0.0
      %v2318 = vand.u32 %v2199, 4294901760
      %v2319 = vsub.f32 %v2199, %v2318
      %v2320 = vand.u32 %v2319, 4294901760
      %v2321 = vsub.f32 %v2319, %v2320
      %v2322 = vand.u32 %v2321, 4294901760
      %2323 = vmatprep.subr.mxu0 %v2322
      %v2324 = vand.u32 %v2198, 4294901760
      %v2325 = vsub.f32 %v2198, %v2324
      %v2326 = vand.u32 %v2325, 4294901760
      %v2327 = vsub.f32 %v2325, %v2326
      %v2328 = vand.u32 %v2327, 4294901760
      %2329 = vmatpush1.msra.mxu0 %v2328
      %v2330 = vand.u32 %v2197, 4294901760
      %v2331 = vsub.f32 %v2197, %v2330
      %v2332 = vand.u32 %v2331, 4294901760
      %v2333 = vsub.f32 %v2331, %v2332
      %v2334 = vand.u32 %v2333, 4294901760
      %2335 = vmatprep.subr.mxu0 %v2334
      %v2336 = vand.u32 %v2196, 4294901760
      %v2337 = vsub.f32 %v2196, %v2336
      %v2338 = vand.u32 %v2337, 4294901760
      %v2339 = vsub.f32 %v2337, %v2338
      %v2340 = vand.u32 %v2339, 4294901760
      %2341 = vmatpush1.msra.mxu0 %v2340
      %v2342 = vand.u32 %v2195, 4294901760
      %v2343 = vsub.f32 %v2195, %v2342
      %v2344 = vand.u32 %v2343, 4294901760
      %v2345 = vsub.f32 %v2343, %v2344
      %v2346 = vand.u32 %v2345, 4294901760
      %2347 = vmatprep.subr.mxu0 %v2346
      %v2348 = vand.u32 %v2194, 4294901760
      %v2349 = vsub.f32 %v2194, %v2348
      %v2350 = vand.u32 %v2349, 4294901760
      %v2351 = vsub.f32 %v2349, %v2350
      %v2352 = vand.u32 %v2351, 4294901760
      %2353 = vmatpush1.msra.mxu0 %v2352
      %v2354 = vand.u32 %v2193, 4294901760
      %v2355 = vsub.f32 %v2193, %v2354
      %v2356 = vand.u32 %v2355, 4294901760
      %v2357 = vsub.f32 %v2355, %v2356
      %v2358 = vand.u32 %v2357, 4294901760
      %2359 = vmatprep.subr.mxu0 %v2358
      %v2360 = vand.u32 %v2192, 4294901760
      %v2361 = vsub.f32 %v2192, %v2360
      %v2362 = vand.u32 %v2361, 4294901760
      %v2363 = vsub.f32 %v2361, %v2362
      %v2364 = vand.u32 %v2363, 4294901760
      %2365 = vmatpush1.msra.mxu0 %v2364
      %2366 = vmatprep.subr.mxu0 0.0
      %2367 = vmatpush2.msra.mxu0 0.0
      %2368 = vmatprep.subr.mxu0 0.0
      %2369 = vmatpush2.msra.mxu0 0.0
      %2370 = vmatprep.subr.mxu0 0.0
      %2371 = vmatpush2.msra.mxu0 0.0
      %2372 = vmatprep.subr.mxu0 0.0
      %2373 = vmatpush2.msra.mxu0 0.0
      %2374 = vmatprep.subr.mxu0 0.0
      %2375 = vmatpush2.msra.mxu0 0.0
      %2376 = vmatprep.subr.mxu0 0.0
      %2377 = vmatpush2.msra.mxu0 0.0
      %2378 = vmatprep.subr.mxu0 0.0
      %2379 = vmatpush2.msra.mxu0 0.0
      %2380 = vmatprep.subr.mxu0 0.0
      %2381 = vmatpush2.msra.mxu0 0.0
      %2382 = vmatprep.subr.mxu0 0.0
      %2383 = vmatpush2.msra.mxu0 0.0
      %2384 = vmatprep.subr.mxu0 0.0
      %2385 = vmatpush2.msra.mxu0 0.0
      %2386 = vmatprep.subr.mxu0 0.0
      %2387 = vmatpush2.msra.mxu0 0.0
      %2388 = vmatprep.subr.mxu0 0.0
      %2389 = vmatpush2.msra.mxu0 0.0
      %2390 = vmatprep.subr.mxu0 0.0
      %2391 = vmatpush2.msra.mxu0 0.0
      %2392 = vmatprep.subr.mxu0 0.0
      %2393 = vmatpush2.msra.mxu0 0.0
      %2394 = vmatprep.subr.mxu0 0.0
      %2395 = vmatpush2.msra.mxu0 0.0
      %2396 = vmatprep.subr.mxu0 0.0
      %2397 = vmatpush2.msra.mxu0 0.0
      %2398 = vmatprep.mubr.f32.mxu0 0.0
      %v2399 = vand.u32 %v2208, 4294901760
      %2400 = vmatmul.mubr.f32.gmra.mxu0 %v2399
      %v2401 = vpop.f32.mrf.mxu0
      %v2402 = vadd.f32 %v2290, %v2401
      %v2403 = vpop.f32.mrf.mxu0
      %v2404 = vadd.f32 %v2292, %v2403
      %2405 = vdwg.mxu0
      %2406 = vmatprep.subr.mxu0 0.0
      %2407 = vmatpush1.msra.mxu0 0.0
      %2408 = vmatprep.subr.mxu0 0.0
      %2409 = vmatpush1.msra.mxu0 0.0
      %2410 = vmatprep.subr.mxu0 0.0
      %2411 = vmatpush1.msra.mxu0 0.0
      %2412 = vmatprep.subr.mxu0 0.0
      %2413 = vmatpush1.msra.mxu0 0.0
      %2414 = vmatprep.subr.mxu0 0.0
      %2415 = vmatpush1.msra.mxu0 0.0
      %2416 = vmatprep.subr.mxu0 0.0
      %2417 = vmatpush1.msra.mxu0 0.0
      %2418 = vmatprep.subr.mxu0 0.0
      %2419 = vmatpush1.msra.mxu0 0.0
      %2420 = vmatprep.subr.mxu0 0.0
      %2421 = vmatpush1.msra.mxu0 0.0
      %2422 = vmatprep.subr.mxu0 0.0
      %2423 = vmatpush1.msra.mxu0 0.0
      %2424 = vmatprep.subr.mxu0 0.0
      %2425 = vmatpush1.msra.mxu0 0.0
      %2426 = vmatprep.subr.mxu0 0.0
      %2427 = vmatpush1.msra.mxu0 0.0
      %2428 = vmatprep.subr.mxu0 0.0
      %2429 = vmatpush1.msra.mxu0 0.0
      %v2430 = vand.u32 %v2199, 4294901760
      %v2431 = vsub.f32 %v2199, %v2430
      %2432 = vmatprep.subr.mxu0 %v2431
      %v2433 = vand.u32 %v2198, 4294901760
      %v2434 = vsub.f32 %v2198, %v2433
      %2435 = vmatpush1.msra.mxu0 %v2434
      %v2436 = vand.u32 %v2197, 4294901760
      %v2437 = vsub.f32 %v2197, %v2436
      %2438 = vmatprep.subr.mxu0 %v2437
      %v2439 = vand.u32 %v2196, 4294901760
      %v2440 = vsub.f32 %v2196, %v2439
      %2441 = vmatpush1.msra.mxu0 %v2440
      %v2442 = vand.u32 %v2195, 4294901760
      %v2443 = vsub.f32 %v2195, %v2442
      %2444 = vmatprep.subr.mxu0 %v2443
      %v2445 = vand.u32 %v2194, 4294901760
      %v2446 = vsub.f32 %v2194, %v2445
      %2447 = vmatpush1.msra.mxu0 %v2446
      %v2448 = vand.u32 %v2193, 4294901760
      %v2449 = vsub.f32 %v2193, %v2448
      %2450 = vmatprep.subr.mxu0 %v2449
      %v2451 = vand.u32 %v2192, 4294901760
      %v2452 = vsub.f32 %v2192, %v2451
      %2453 = vmatpush1.msra.mxu0 %v2452
      %2454 = vmatprep.subr.mxu0 0.0
      %2455 = vmatpush2.msra.mxu0 0.0
      %2456 = vmatprep.subr.mxu0 0.0
      %2457 = vmatpush2.msra.mxu0 0.0
      %2458 = vmatprep.subr.mxu0 0.0
      %2459 = vmatpush2.msra.mxu0 0.0
      %2460 = vmatprep.subr.mxu0 0.0
      %2461 = vmatpush2.msra.mxu0 0.0
      %2462 = vmatprep.subr.mxu0 0.0
      %2463 = vmatpush2.msra.mxu0 0.0
      %2464 = vmatprep.subr.mxu0 0.0
      %2465 = vmatpush2.msra.mxu0 0.0
      %2466 = vmatprep.subr.mxu0 0.0
      %2467 = vmatpush2.msra.mxu0 0.0
      %2468 = vmatprep.subr.mxu0 0.0
      %2469 = vmatpush2.msra.mxu0 0.0
      %2470 = vmatprep.subr.mxu0 0.0
      %2471 = vmatpush2.msra.mxu0 0.0
      %2472 = vmatprep.subr.mxu0 0.0
      %2473 = vmatpush2.msra.mxu0 0.0
      %2474 = vmatprep.subr.mxu0 0.0
      %2475 = vmatpush2.msra.mxu0 0.0
      %2476 = vmatprep.subr.mxu0 0.0
      %2477 = vmatpush2.msra.mxu0 0.0
      %2478 = vmatprep.subr.mxu0 0.0
      %2479 = vmatpush2.msra.mxu0 0.0
      %2480 = vmatprep.subr.mxu0 0.0
      %2481 = vmatpush2.msra.mxu0 0.0
      %2482 = vmatprep.subr.mxu0 0.0
      %2483 = vmatpush2.msra.mxu0 0.0
      %2484 = vmatprep.subr.mxu0 0.0
      %2485 = vmatpush2.msra.mxu0 0.0
      %2486 = vmatprep.mubr.f32.mxu0 0.0
      %v2487 = vand.u32 %v2208, 4294901760
      %v2488 = vsub.f32 %v2208, %v2487
      %2489 = vmatmul.mubr.f32.gmra.mxu0 %v2488
      %v2490 = vpop.f32.mrf.mxu0
      %v2491 = vadd.f32 %v2402, %v2490
      %v2492 = vpop.f32.mrf.mxu0
      %v2493 = vadd.f32 %v2404, %v2492
      %2494 = vdwg.mxu0
      %2495 = vmatprep.subr.mxu0 0.0
      %2496 = vmatpush1.msra.mxu0 0.0
      %2497 = vmatprep.subr.mxu0 0.0
      %2498 = vmatpush1.msra.mxu0 0.0
      %2499 = vmatprep.subr.mxu0 0.0
      %2500 = vmatpush1.msra.mxu0 0.0
      %2501 = vmatprep.subr.mxu0 0.0
      %2502 = vmatpush1.msra.mxu0 0.0
      %2503 = vmatprep.subr.mxu0 0.0
      %2504 = vmatpush1.msra.mxu0 0.0
      %2505 = vmatprep.subr.mxu0 0.0
      %2506 = vmatpush1.msra.mxu0 0.0
      %2507 = vmatprep.subr.mxu0 0.0
      %2508 = vmatpush1.msra.mxu0 0.0
      %2509 = vmatprep.subr.mxu0 0.0
      %2510 = vmatpush1.msra.mxu0 0.0
      %2511 = vmatprep.subr.mxu0 0.0
      %2512 = vmatpush1.msra.mxu0 0.0
      %2513 = vmatprep.subr.mxu0 0.0
      %2514 = vmatpush1.msra.mxu0 0.0
      %2515 = vmatprep.subr.mxu0 0.0
      %2516 = vmatpush1.msra.mxu0 0.0
      %2517 = vmatprep.subr.mxu0 0.0
      %2518 = vmatpush1.msra.mxu0 0.0
      %v2519 = vand.u32 %v2199, 4294901760
      %2520 = vmatprep.subr.mxu0 %v2519
      %v2521 = vand.u32 %v2198, 4294901760
      %2522 = vmatpush1.msra.mxu0 %v2521
      %v2523 = vand.u32 %v2197, 4294901760
      %2524 = vmatprep.subr.mxu0 %v2523
      %v2525 = vand.u32 %v2196, 4294901760
      %2526 = vmatpush1.msra.mxu0 %v2525
      %v2527 = vand.u32 %v2195, 4294901760
      %2528 = vmatprep.subr.mxu0 %v2527
      %v2529 = vand.u32 %v2194, 4294901760
      %2530 = vmatpush1.msra.mxu0 %v2529
      %v2531 = vand.u32 %v2193, 4294901760
      %2532 = vmatprep.subr.mxu0 %v2531
      %v2533 = vand.u32 %v2192, 4294901760
      %2534 = vmatpush1.msra.mxu0 %v2533
      %2535 = vmatprep.subr.mxu0 0.0
      %2536 = vmatpush2.msra.mxu0 0.0
      %2537 = vmatprep.subr.mxu0 0.0
      %2538 = vmatpush2.msra.mxu0 0.0
      %2539 = vmatprep.subr.mxu0 0.0
      %2540 = vmatpush2.msra.mxu0 0.0
      %2541 = vmatprep.subr.mxu0 0.0
      %2542 = vmatpush2.msra.mxu0 0.0
      %2543 = vmatprep.subr.mxu0 0.0
      %2544 = vmatpush2.msra.mxu0 0.0
      %2545 = vmatprep.subr.mxu0 0.0
      %2546 = vmatpush2.msra.mxu0 0.0
      %2547 = vmatprep.subr.mxu0 0.0
      %2548 = vmatpush2.msra.mxu0 0.0
      %2549 = vmatprep.subr.mxu0 0.0
      %2550 = vmatpush2.msra.mxu0 0.0
      %2551 = vmatprep.subr.mxu0 0.0
      %2552 = vmatpush2.msra.mxu0 0.0
      %2553 = vmatprep.subr.mxu0 0.0
      %2554 = vmatpush2.msra.mxu0 0.0
      %2555 = vmatprep.subr.mxu0 0.0
      %2556 = vmatpush2.msra.mxu0 0.0
      %2557 = vmatprep.subr.mxu0 0.0
      %2558 = vmatpush2.msra.mxu0 0.0
      %2559 = vmatprep.subr.mxu0 0.0
      %2560 = vmatpush2.msra.mxu0 0.0
      %2561 = vmatprep.subr.mxu0 0.0
      %2562 = vmatpush2.msra.mxu0 0.0
      %2563 = vmatprep.subr.mxu0 0.0
      %2564 = vmatpush2.msra.mxu0 0.0
      %2565 = vmatprep.subr.mxu0 0.0
      %2566 = vmatpush2.msra.mxu0 0.0
      %2567 = vmatprep.mubr.f32.mxu0 0.0
      %v2568 = vand.u32 %v2208, 4294901760
      %v2569 = vsub.f32 %v2208, %v2568
      %v2570 = vand.u32 %v2569, 4294901760
      %2571 = vmatmul.mubr.f32.gmra.mxu0 %v2570
      %v2572 = vpop.f32.mrf.mxu0
      %v2573 = vadd.f32 %v2491, %v2572
      %v2574 = vpop.f32.mrf.mxu0
      %v2575 = vadd.f32 %v2493, %v2574
      %2576 = vdwg.mxu0
      %2577 = vmatprep.subr.mxu0 0.0
      %2578 = vmatpush1.msra.mxu0 0.0
      %2579 = vmatprep.subr.mxu0 0.0
      %2580 = vmatpush1.msra.mxu0 0.0
      %2581 = vmatprep.subr.mxu0 0.0
      %2582 = vmatpush1.msra.mxu0 0.0
      %2583 = vmatprep.subr.mxu0 0.0
      %2584 = vmatpush1.msra.mxu0 0.0
      %2585 = vmatprep.subr.mxu0 0.0
      %2586 = vmatpush1.msra.mxu0 0.0
      %2587 = vmatprep.subr.mxu0 0.0
      %2588 = vmatpush1.msra.mxu0 0.0
      %2589 = vmatprep.subr.mxu0 0.0
      %2590 = vmatpush1.msra.mxu0 0.0
      %2591 = vmatprep.subr.mxu0 0.0
      %2592 = vmatpush1.msra.mxu0 0.0
      %2593 = vmatprep.subr.mxu0 0.0
      %2594 = vmatpush1.msra.mxu0 0.0
      %2595 = vmatprep.subr.mxu0 0.0
      %2596 = vmatpush1.msra.mxu0 0.0
      %2597 = vmatprep.subr.mxu0 0.0
      %2598 = vmatpush1.msra.mxu0 0.0
      %2599 = vmatprep.subr.mxu0 0.0
      %2600 = vmatpush1.msra.mxu0 0.0
      %v2601 = vand.u32 %v2199, 4294901760
      %v2602 = vsub.f32 %v2199, %v2601
      %v2603 = vand.u32 %v2602, 4294901760
      %2604 = vmatprep.subr.mxu0 %v2603
      %v2605 = vand.u32 %v2198, 4294901760
      %v2606 = vsub.f32 %v2198, %v2605
      %v2607 = vand.u32 %v2606, 4294901760
      %2608 = vmatpush1.msra.mxu0 %v2607
      %v2609 = vand.u32 %v2197, 4294901760
      %v2610 = vsub.f32 %v2197, %v2609
      %v2611 = vand.u32 %v2610, 4294901760
      %2612 = vmatprep.subr.mxu0 %v2611
      %v2613 = vand.u32 %v2196, 4294901760
      %v2614 = vsub.f32 %v2196, %v2613
      %v2615 = vand.u32 %v2614, 4294901760
      %2616 = vmatpush1.msra.mxu0 %v2615
      %v2617 = vand.u32 %v2195, 4294901760
      %v2618 = vsub.f32 %v2195, %v2617
      %v2619 = vand.u32 %v2618, 4294901760
      %2620 = vmatprep.subr.mxu0 %v2619
      %v2621 = vand.u32 %v2194, 4294901760
      %v2622 = vsub.f32 %v2194, %v2621
      %v2623 = vand.u32 %v2622, 4294901760
      %2624 = vmatpush1.msra.mxu0 %v2623
      %v2625 = vand.u32 %v2193, 4294901760
      %v2626 = vsub.f32 %v2193, %v2625
      %v2627 = vand.u32 %v2626, 4294901760
      %2628 = vmatprep.subr.mxu0 %v2627
      %v2629 = vand.u32 %v2192, 4294901760
      %v2630 = vsub.f32 %v2192, %v2629
      %v2631 = vand.u32 %v2630, 4294901760
      %2632 = vmatpush1.msra.mxu0 %v2631
      %2633 = vmatprep.subr.mxu0 0.0
      %2634 = vmatpush2.msra.mxu0 0.0
      %2635 = vmatprep.subr.mxu0 0.0
      %2636 = vmatpush2.msra.mxu0 0.0
      %2637 = vmatprep.subr.mxu0 0.0
      %2638 = vmatpush2.msra.mxu0 0.0
      %2639 = vmatprep.subr.mxu0 0.0
      %2640 = vmatpush2.msra.mxu0 0.0
      %2641 = vmatprep.subr.mxu0 0.0
      %2642 = vmatpush2.msra.mxu0 0.0
      %2643 = vmatprep.subr.mxu0 0.0
      %2644 = vmatpush2.msra.mxu0 0.0
      %2645 = vmatprep.subr.mxu0 0.0
      %2646 = vmatpush2.msra.mxu0 0.0
      %2647 = vmatprep.subr.mxu0 0.0
      %2648 = vmatpush2.msra.mxu0 0.0
      %2649 = vmatprep.subr.mxu0 0.0
      %2650 = vmatpush2.msra.mxu0 0.0
      %2651 = vmatprep.subr.mxu0 0.0
      %2652 = vmatpush2.msra.mxu0 0.0
      %2653 = vmatprep.subr.mxu0 0.0
      %2654 = vmatpush2.msra.mxu0 0.0
      %2655 = vmatprep.subr.mxu0 0.0
      %2656 = vmatpush2.msra.mxu0 0.0
      %2657 = vmatprep.subr.mxu0 0.0
      %2658 = vmatpush2.msra.mxu0 0.0
      %2659 = vmatprep.subr.mxu0 0.0
      %2660 = vmatpush2.msra.mxu0 0.0
      %2661 = vmatprep.subr.mxu0 0.0
      %2662 = vmatpush2.msra.mxu0 0.0
      %2663 = vmatprep.subr.mxu0 0.0
      %2664 = vmatpush2.msra.mxu0 0.0
      %2665 = vmatprep.mubr.f32.mxu0 0.0
      %v2666 = vand.u32 %v2208, 4294901760
      %2667 = vmatmul.mubr.f32.gmra.mxu0 %v2666
      %v2668 = vpop.f32.mrf.mxu0
      %v2669 = vadd.f32 %v2573, %v2668
      %v2670 = vpop.f32.mrf.mxu0
      %v2671 = vadd.f32 %v2575, %v2670
      %2672 = vdwg.mxu0
      %2673 = vmatprep.subr.mxu0 0.0
      %2674 = vmatpush1.msra.mxu0 0.0
      %2675 = vmatprep.subr.mxu0 0.0
      %2676 = vmatpush1.msra.mxu0 0.0
      %2677 = vmatprep.subr.mxu0 0.0
      %2678 = vmatpush1.msra.mxu0 0.0
      %2679 = vmatprep.subr.mxu0 0.0
      %2680 = vmatpush1.msra.mxu0 0.0
      %2681 = vmatprep.subr.mxu0 0.0
      %2682 = vmatpush1.msra.mxu0 0.0
      %2683 = vmatprep.subr.mxu0 0.0
      %2684 = vmatpush1.msra.mxu0 0.0
      %2685 = vmatprep.subr.mxu0 0.0
      %2686 = vmatpush1.msra.mxu0 0.0
      %2687 = vmatprep.subr.mxu0 0.0
      %2688 = vmatpush1.msra.mxu0 0.0
      %2689 = vmatprep.subr.mxu0 0.0
      %2690 = vmatpush1.msra.mxu0 0.0
      %2691 = vmatprep.subr.mxu0 0.0
      %2692 = vmatpush1.msra.mxu0 0.0
      %2693 = vmatprep.subr.mxu0 0.0
      %2694 = vmatpush1.msra.mxu0 0.0
      %2695 = vmatprep.subr.mxu0 0.0
      %2696 = vmatpush1.msra.mxu0 0.0
      %v2697 = vand.u32 %v2199, 4294901760
      %2698 = vmatprep.subr.mxu0 %v2697
      %v2699 = vand.u32 %v2198, 4294901760
      %2700 = vmatpush1.msra.mxu0 %v2699
      %v2701 = vand.u32 %v2197, 4294901760
      %2702 = vmatprep.subr.mxu0 %v2701
      %v2703 = vand.u32 %v2196, 4294901760
      %2704 = vmatpush1.msra.mxu0 %v2703
      %v2705 = vand.u32 %v2195, 4294901760
      %2706 = vmatprep.subr.mxu0 %v2705
      %v2707 = vand.u32 %v2194, 4294901760
      %2708 = vmatpush1.msra.mxu0 %v2707
      %v2709 = vand.u32 %v2193, 4294901760
      %2710 = vmatprep.subr.mxu0 %v2709
      %v2711 = vand.u32 %v2192, 4294901760
      %2712 = vmatpush1.msra.mxu0 %v2711
      %2713 = vmatprep.subr.mxu0 0.0
      %2714 = vmatpush2.msra.mxu0 0.0
      %2715 = vmatprep.subr.mxu0 0.0
      %2716 = vmatpush2.msra.mxu0 0.0
      %2717 = vmatprep.subr.mxu0 0.0
      %2718 = vmatpush2.msra.mxu0 0.0
      %2719 = vmatprep.subr.mxu0 0.0
      %2720 = vmatpush2.msra.mxu0 0.0
      %2721 = vmatprep.subr.mxu0 0.0
      %2722 = vmatpush2.msra.mxu0 0.0
      %2723 = vmatprep.subr.mxu0 0.0
      %2724 = vmatpush2.msra.mxu0 0.0
      %2725 = vmatprep.subr.mxu0 0.0
      %2726 = vmatpush2.msra.mxu0 0.0
      %2727 = vmatprep.subr.mxu0 0.0
      %2728 = vmatpush2.msra.mxu0 0.0
      %2729 = vmatprep.subr.mxu0 0.0
      %2730 = vmatpush2.msra.mxu0 0.0
      %2731 = vmatprep.subr.mxu0 0.0
      %2732 = vmatpush2.msra.mxu0 0.0
      %2733 = vmatprep.subr.mxu0 0.0
      %2734 = vmatpush2.msra.mxu0 0.0
      %2735 = vmatprep.subr.mxu0 0.0
      %2736 = vmatpush2.msra.mxu0 0.0
      %2737 = vmatprep.subr.mxu0 0.0
      %2738 = vmatpush2.msra.mxu0 0.0
      %2739 = vmatprep.subr.mxu0 0.0
      %2740 = vmatpush2.msra.mxu0 0.0
      %2741 = vmatprep.subr.mxu0 0.0
      %2742 = vmatpush2.msra.mxu0 0.0
      %2743 = vmatprep.subr.mxu0 0.0
      %2744 = vmatpush2.msra.mxu0 0.0
      %2745 = vmatprep.mubr.f32.mxu0 0.0
      %v2746 = vand.u32 %v2208, 4294901760
      %2747 = vmatmul.mubr.f32.gmra.mxu0 %v2746
      %v2748 = vpop.f32.mrf.mxu0
      %v2749 = vadd.f32 %v2669, %v2748
      %v2750 = vpop.f32.mrf.mxu0
      %v2751 = vadd.f32 %v2671, %v2750
      %2752 = vdwg.mxu0
      %2753 = vxpose.xlu0.b32.start [1/16] %v2749, 128
      %2754 = vxpose.xlu0.b32.cont [2/16] 0.0, 128
      %2755 = vxpose.xlu0.b32.cont [3/16] 0.0, 128
      %2756 = vxpose.xlu0.b32.cont [4/16] 0.0, 128
      %2757 = vxpose.xlu0.b32.cont [5/16] 0.0, 128
      %2758 = vxpose.xlu0.b32.cont [6/16] 0.0, 128
      %2759 = vxpose.xlu0.b32.cont [7/16] 0.0, 128
      %2760 = vxpose.xlu0.b32.cont [8/16] 0.0, 128
      %2761 = vxpose.xlu0.b32.cont [9/16] 0.0, 128
      %2762 = vxpose.xlu0.b32.cont [10/16] 0.0, 128
      %2763 = vxpose.xlu0.b32.cont [11/16] 0.0, 128
      %2764 = vxpose.xlu0.b32.cont [12/16] 0.0, 128
      %2765 = vxpose.xlu0.b32.cont [13/16] 0.0, 128
      %2766 = vxpose.xlu0.b32.cont [14/16] 0.0, 128
      %2767 = vxpose.xlu0.b32.cont [15/16] 0.0, 128
      %2768 = vxpose.xlu0.b32.end [16/16] 0.0, 128
      %v2769 = vpop.trf.xlu0
      %v2770 = vpop.trf.xlu0
      %v2771 = vpop.trf.xlu0
      %v2772 = vpop.trf.xlu0
      %v2773 = vpop.trf.xlu0
      %v2774 = vpop.trf.xlu0
      %v2775 = vpop.trf.xlu0
      %v2776 = vpop.trf.xlu0
      %v2777 = vpop.trf.xlu0
      %v2778 = vpop.trf.xlu0
      %v2779 = vpop.trf.xlu0
      %v2780 = vpop.trf.xlu0
      %v2781 = vpop.trf.xlu0
      %v2782 = vpop.trf.xlu0
      %v2783 = vpop.trf.xlu0
      %v2784 = vpop.trf.xlu0
      %2785 = vxpose.xlu0.b32.start [1/16] %v2751, 128
      %2786 = vxpose.xlu0.b32.cont [2/16] 0.0, 128
      %2787 = vxpose.xlu0.b32.cont [3/16] 0.0, 128
      %2788 = vxpose.xlu0.b32.cont [4/16] 0.0, 128
      %2789 = vxpose.xlu0.b32.cont [5/16] 0.0, 128
      %2790 = vxpose.xlu0.b32.cont [6/16] 0.0, 128
      %2791 = vxpose.xlu0.b32.cont [7/16] 0.0, 128
      %2792 = vxpose.xlu0.b32.cont [8/16] 0.0, 128
      %2793 = vxpose.xlu0.b32.cont [9/16] 0.0, 128
      %2794 = vxpose.xlu0.b32.cont [10/16] 0.0, 128
      %2795 = vxpose.xlu0.b32.cont [11/16] 0.0, 128
      %2796 = vxpose.xlu0.b32.cont [12/16] 0.0, 128
      %2797 = vxpose.xlu0.b32.cont [13/16] 0.0, 128
      %2798 = vxpose.xlu0.b32.cont [14/16] 0.0, 128
      %2799 = vxpose.xlu0.b32.cont [15/16] 0.0, 128
      %2800 = vxpose.xlu0.b32.end [16/16] 0.0, 128
      %v2801 = vpop.trf.xlu0
      %v2802 = vpop.trf.xlu0
      %v2803 = vpop.trf.xlu0
      %v2804 = vpop.trf.xlu0
      %v2805 = vpop.trf.xlu0
      %v2806 = vpop.trf.xlu0
      %v2807 = vpop.trf.xlu0
      %v2808 = vpop.trf.xlu0
      %v2809 = vpop.trf.xlu0
      %v2810 = vpop.trf.xlu0
      %v2811 = vpop.trf.xlu0
      %v2812 = vpop.trf.xlu0
      %v2813 = vpop.trf.xlu0
      %v2814 = vpop.trf.xlu0
      %v2815 = vpop.trf.xlu0
      %v2816 = vpop.trf.xlu0
      %vm2817 = vcmask 64512
      %2818 = vst.msk [vmem:[%s280] sm:$0xff] %vm2817, %v2769
      %2819 = vst.msk [vmem:[%s280 + $0x8] sm:$0xff] %vm2817, %v2770
      %2820 = vst.msk [vmem:[%s280 + $0x10] sm:$0xff] %vm2817, %v2771
      %2821 = vst.msk [vmem:[%s280 + $0x18] sm:$0xff] %vm2817, %v2772
      %2822 = vst.msk [vmem:[%s280 + $0x20] sm:$0xff] %vm2817, %v2773
      %2823 = vst.msk [vmem:[%s280 + $0x28] sm:$0xff] %vm2817, %v2774
      %2824 = vst.msk [vmem:[%s280 + $0x30] sm:$0xff] %vm2817, %v2775
      %2825 = vst.msk [vmem:[%s280 + $0x38] sm:$0xff] %vm2817, %v2776
      %2826 = vst.msk [vmem:[%s280 + $0x40] sm:$0xff] %vm2817, %v2777
      %2827 = vst.msk [vmem:[%s280 + $0x48] sm:$0xff] %vm2817, %v2778
      %2828 = vst.msk [vmem:[%s280 + $0x50] sm:$0xff] %vm2817, %v2779
      %2829 = vst.msk [vmem:[%s280 + $0x58] sm:$0xff] %vm2817, %v2780
      %2830 = vst.msk [vmem:[%s280 + $0x60] sm:$0xff] %vm2817, %v2781
      %2831 = vst.msk [vmem:[%s280 + $0x68] sm:$0xff] %vm2817, %v2782
      %2832 = vst.msk [vmem:[%s280 + $0x70] sm:$0xff] %vm2817, %v2783
      %2833 = vst.msk [vmem:[%s280 + $0x78] sm:$0xff] %vm2817, %v2784
      %2834 = vst.msk [vmem:[%s280 + $0x80] sm:$0xff] %vm2817, %v2801
      %2835 = vst.msk [vmem:[%s280 + $0x88] sm:$0xff] %vm2817, %v2802
      %2836 = vst.msk [vmem:[%s280 + $0x90] sm:$0xff] %vm2817, %v2803
      %2837 = vst.msk [vmem:[%s280 + $0x98] sm:$0xff] %vm2817, %v2804
      %2838 = vst.msk [vmem:[%s280 + $0xa0] sm:$0xff] %vm2817, %v2805
      %2839 = vst.msk [vmem:[%s280 + $0xa8] sm:$0xff] %vm2817, %v2806
      %2840 = vst.msk [vmem:[%s280 + $0xb0] sm:$0xff] %vm2817, %v2807
      %2841 = vst.msk [vmem:[%s280 + $0xb8] sm:$0xff] %vm2817, %v2808
      %2842 = vst.msk [vmem:[%s280 + $0xc0] sm:$0xff] %vm2817, %v2809
      %2843 = vst.msk [vmem:[%s280 + $0xc8] sm:$0xff] %vm2817, %v2810
      %2844 = vst.msk [vmem:[%s280 + $0xd0] sm:$0xff] %vm2817, %v2811
      %2845 = vst.msk [vmem:[%s280 + $0xd8] sm:$0xff] %vm2817, %v2812
      %2846 = vst.msk [vmem:[%s280 + $0xe0] sm:$0xff] %vm2817, %v2813
      %2847 = vst.msk [vmem:[%s280 + $0xe8] sm:$0xff] %vm2817, %v2814
      %2848 = vst.msk [vmem:[%s280 + $0xf0] sm:$0xff] %vm2817, %v2815
      %2849 = vst.msk [vmem:[%s280 + $0xf8] sm:$0xff] %vm2817, %v2816
      %s2850 = smul.u32 32, %s18
      %p2851 = scmp.lt.s32.totalorder %s2850, 63
      %s2852 = scalar_select %p2851, %s2850, 63
      %s2853 = smul.addr %s2852, 8
      %s2854 = scalar_lea.vmem %s7, %s2853
      // Predicated region
      $region49: #{tpu_custom_call.1} parent=47 // pred_check
        %p2855 = pneg %p188
      $region50: #{tpu_custom_call.1} parent=47 // pred_check_branch
        %2857 = sbr.rel (%p2855) target = $region52
      $region51: #{tpu_custom_call.1} parent=47 // pred_region
        %s2858 = smul.u32 32, %s18
      $region52: #{tpu_custom_call.1} parent=47 // pred_fallthru
        _
    $region48: #{tpu_custom_call.1} parent=5 // pred_fallthru
      _
    %p2859 = scmp.le.s32.totalorder 2, %s13
    // Predicated region
    $region53: #{tpu_custom_call.1} parent=5 // pred_check
      %p2860 = pneg %p2859
    $region54: #{tpu_custom_call.1} parent=5 // pred_check_branch
      %2862 = sbr.rel (%p2860) target = $region56
    $region55: #{tpu_custom_call.1} parent=5 // pred_region
      %s2863 = ssub.s32 %s13, 2
      // Predicated region
      $region57: #{tpu_custom_call.1} parent=55 // pred_check
        %p2864 = pneg %p194
      $region58: #{tpu_custom_call.1} parent=55 // pred_check_branch
        %2866 = sbr.rel (%p2864) target = $region60
      $region59: #{tpu_custom_call.1} parent=55 // pred_region
        %s2867 = smul.u32 32, %s19
        %p2868 = scmp.lt.s32.totalorder %s2867, 63
        %s2869 = scalar_select %p2868, %s2867, 63
        %s2870 = smul.addr %s2869, 8
        %s2871 = scalar_lea.vmem %s7, %s2870
      $region60: #{tpu_custom_call.1} parent=55 // pred_fallthru
        _
    $region56: #{tpu_custom_call.1} parent=5 // pred_fallthru
      _
  $region6: #{tpu_custom_call.1} parent=0 // loop_footer
    %s17 = sadd.s32 1, %s13
  $region7: #{tpu_custom_call.1} parent=0 // loop_footer_branch
    %12 = sbr.rel target = $region3
  $region8: #{tpu_custom_call.1} parent=0 // loop_exit
    _

</llo_original>
